<compile_context>
chip_gen: v5e
topology: v5e:2x2
jax: 0.10.0
libtpu: 0.0.40
codegen_flags: <defaults>
</compile_context>

<pallas_src>
import functools

import jax
import jax.numpy as jnp
from jax import lax
from jax.experimental import pallas as pl
from jax.experimental.pallas import tpu as pltpu

_LANE = 128


def _round_up(x, m):
    return (x + m - 1) // m * m


def _pick_tile(pref, n_pad):
    """Largest power-of-two multiple of 128 that is <= pref and divides n_pad."""
    t = _LANE
    while t * 2 <= pref and n_pad % (t * 2) == 0:
        t *= 2
    return t


# --------------------------------------------------------------------------- kernels
def _gcn_layer1_kernel(training, keep_prob,
                       seed_ref, a_ref, dr_ref, dk_ref, x_ref, w1_ref, b1_ref,
                       h_ref, acc_ref):
    """Grid step (i, k) of  h = dropout(relu(A_hat @ (X @ W1) + b1))."""
    i = pl.program_id(0)
    k = pl.program_id(1)

    @pl.when(k == 0)
    def _():
        acc_ref[...] = jnp.zeros_like(acc_ref)

    # Tiny (tk, H) projection (recomputed per row tile; cheap vs. the A-tile matmul).
    # Fold D^{-1/2}[col] here so the big (tm, tk) bf16 A tile feeds the MXU untouched.
    xw = jnp.dot(x_ref[...], w1_ref[...], preferred_element_type=jnp.float32)
    xw = (xw * dk_ref[...]).astype(jnp.bfloat16)
    acc_ref[...] += jnp.dot(a_ref[...], xw, preferred_element_type=jnp.float32)

    @pl.when(k == pl.num_programs(1) - 1)
    def _():
        h = acc_ref[...] * dr_ref[...] + b1_ref[...]       # fold D^{-1/2}[row] + bias
        h = jnp.maximum(h, 0.0)
        if training:
            # TODO(synk): TPU hardware PRNG -> statistically correct dropout but not
            # bit-identical to torch's RNG stream.
            pltpu.prng_seed(seed_ref[0] + i)               # distinct seed per row tile
            bits = pltpu.bitcast(pltpu.prng_random_bits(h.shape), jnp.uint32)
            thresh = jnp.uint32(int(keep_prob * (2.0 ** 32)))
            h = jnp.where(bits < thresh, h * (1.0 / keep_prob), 0.0)
        h_ref[...] = h.astype(h_ref.dtype)


def _gcn_layer2_kernel(dim_out,
                       a_ref, dr_ref, dk_ref, h_ref, w2_ref, b2_ref,
                       out_ref, acc_ref):
    """Grid step (i, k) of  out = log_softmax(A_hat @ (H @ W2) + b2)."""
    k = pl.program_id(1)

    @pl.when(k == 0)
    def _():
        acc_ref[...] = jnp.zeros_like(acc_ref)

    hw = jnp.dot(h_ref[...], w2_ref[...], preferred_element_type=jnp.float32)
    hw = (hw * dk_ref[...]).astype(jnp.bfloat16)
    acc_ref[...] += jnp.dot(a_ref[...], hw, preferred_element_type=jnp.float32)

    @pl.when(k == pl.num_programs(1) - 1)
    def _():
        logits = acc_ref[...] * dr_ref[...] + b2_ref[...]
        # Output is lane-dense (dim_out padded to 128); mask padded lanes out of the
        # softmax so the normalization only sees the real classes.
        lane = lax.broadcasted_iota(jnp.int32, logits.shape, 1)
        logits = jnp.where(lane < dim_out, logits, -1e30)
        m = jnp.max(logits, axis=-1, keepdims=True)
        z = logits - m
        lse = jnp.log(jnp.sum(jnp.exp(z), axis=-1, keepdims=True))
        out_ref[...] = z - lse


# ----------------------------------------------------------------- graph preprocessing
def build_graph_operands(edge_index, edge_weight, num_nodes, num_nodes_padded=None):
    """Dense un-normalized (A + I) and dinv = D^{-1/2}.

    The symmetric normalization D^{-1/2}(A+I)D^{-1/2} is applied inside the Pallas
    kernels, so the only O(N^2) array written to HBM is the (bf16) adjacency itself.
    The index scatter is pure gather/scatter glue and stays in plain JAX.
    """
    if num_nodes_padded is None:
        num_nodes_padded = num_nodes
    src, dst = edge_index[0], edge_index[1]
    if edge_weight is None:
        edge_weight = jnp.ones(src.shape[0], jnp.float32)
    edge_weight = edge_weight.astype(jnp.float32)

    a = jnp.zeros((num_nodes_padded, num_nodes_padded), jnp.float32)
    a = a.at[dst, src].add(edge_weight)                          # A[dst, src] = w
    diag = jnp.arange(num_nodes)
    a = a.at[diag, diag].add(1.0)                                # self loops (weight 1)

    deg = jnp.ones((num_nodes,), jnp.float32).at[dst].add(edge_weight)
    dinv = jnp.where(deg > 0, lax.rsqrt(deg), 0.0)
    dinv = jnp.zeros((num_nodes_padded,), jnp.float32).at[:num_nodes].set(dinv)
    return a, dinv


# ------------------------------------------------------------------------- forward
def gcn_forward(x, edge_index, params, edge_weight=None, *,
                training=False, seed=0, tm=256, tk=1024):
    n, f_in = x.shape
    dim_h = params["w1"].shape[1]
    dim_out = params["w2"].shape[1]

    # ---- tiling plan (node axis padded to a multiple of the tiles) -------------
    n_pad = _round_up(n, _LANE)
    tm = _pick_tile(tm, n_pad)
    tk = _pick_tile(tk, n_pad)
    grid = (n_pad // tm, n_pad // tk)

    f_in_p = _round_up(f_in, _LANE)
    dim_h_p = _round_up(dim_h, _LANE)
    dim_o_p = _round_up(dim_out, _LANE)

    # ---- operands ---------------------------------------------------------------
    a, dinv = build_graph_operands(edge_index, edge_weight, n, n_pad)
    a_bf = a.astype(jnp.bfloat16)            # bf16 A: half the HBM traffic / VMEM
    dinv_2d = dinv[:, None]                  # (n_pad, 1) f32, used for rows and K

    x_p = jnp.zeros((n_pad, f_in_p), jnp.bfloat16).at[:n, :f_in].set(
        x.astype(jnp.bfloat16))
    w1_p = jnp.zeros((f_in_p, dim_h_p), jnp.bfloat16).at[:f_in, :dim_h].set(
        params["w1"].astype(jnp.bfloat16))
    b1_p = jnp.zeros((1, dim_h_p), jnp.float32).at[:, :dim_h].set(params["b1"])
    w2_p = jnp.zeros((dim_h_p, dim_o_p), jnp.bfloat16).at[:dim_h, :dim_out].set(
        params["w2"].astype(jnp.bfloat16))
    b2_p = jnp.zeros((1, dim_o_p), jnp.float32).at[:, :dim_out].set(params["b2"])

    seed_arr = jnp.array([seed], jnp.int32)
    cp = pltpu.CompilerParams(dimension_semantics=("parallel", "arbitrary"))

    # ---- layer 1: h = dropout(relu(A_hat @ (X @ W1) + b1)) ----------------------
    h = pl.pallas_call(
        functools.partial(_gcn_layer1_kernel, training, 0.8),
        out_shape=jax.ShapeDtypeStruct((n_pad, dim_h_p), jnp.bfloat16),
        grid=grid,
        in_specs=[
            pl.BlockSpec(memory_space=pltpu.SMEM),                   # seed (scalar)
            pl.BlockSpec((tm, tk), lambda i, k: (i, k)),             # A (bf16)
            pl.BlockSpec((tm, 1), lambda i, k: (i, 0)),              # dinv[row]
            pl.BlockSpec((tk, 1), lambda i, k: (k, 0)),              # dinv[K]
            pl.BlockSpec((tk, f_in_p), lambda i, k: (k, 0)),         # X
            pl.BlockSpec((f_in_p, dim_h_p), lambda i, k: (0, 0)),    # W1
            pl.BlockSpec((1, dim_h_p), lambda i, k: (0, 0)),         # b1
        ],
        out_specs=pl.BlockSpec((tm, dim_h_p), lambda i, k: (i, 0)),
        scratch_shapes=[pltpu.VMEM((tm, dim_h_p), jnp.float32)],
        compiler_params=cp,
    )(seed_arr, a_bf, dinv_2d, dinv_2d, x_p, w1_p, b1_p)

    # h makes a small (N x 128 bf16) round-trip through HBM between the two layers;
    # this is negligible next to the N^2 adjacency traffic.
    # ---- layer 2: out = log_softmax(A_hat @ (H @ W2) + b2) ----------------------
    out_p = pl.pallas_call(
        functools.partial(_gcn_layer2_kernel, dim_out),
        out_shape=jax.ShapeDtypeStruct((n_pad, dim_o_p), jnp.float32),
        grid=grid,
        in_specs=[
            pl.BlockSpec((tm, tk), lambda i, k: (i, k)),             # A (bf16)
            pl.BlockSpec((tm, 1), lambda i, k: (i, 0)),              # dinv[row]
            pl.BlockSpec((tk, 1), lambda i, k: (k, 0)),              # dinv[K]
            pl.BlockSpec((tk, dim_h_p), lambda i, k: (k, 0)),        # H (bf16)
            pl.BlockSpec((dim_h_p, dim_o_p), lambda i, k: (0, 0)),   # W2
            pl.BlockSpec((1, dim_o_p), lambda i, k: (0, 0)),         # b2
        ],
        out_specs=pl.BlockSpec((tm, dim_o_p), lambda i, k: (i, 0)),
        scratch_shapes=[pltpu.VMEM((tm, dim_o_p), jnp.float32)],
        compiler_params=cp,
    )(a_bf, dinv_2d, dinv_2d, h, w2_p, b2_p)

    return out_p[:n, :dim_out]


# --------------------------------------------------------------------------- params
def init_params(key, dim_in, dim_h, dim_out):
    """GCNConv: Glorot-uniform weight (stored transposed as (in, out)), zero bias."""
    k1, k2 = jax.random.split(key)

    def glorot(k, fan_in, fan_out):
        bound = (6.0 / (fan_in + fan_out)) ** 0.5
        return jax.random.uniform(k, (fan_in, fan_out), jnp.float32, -bound, bound)

    return {
        "w1": glorot(k1, dim_in, dim_h),
        "b1": jnp.zeros((1, dim_h), jnp.float32),
        "w2": glorot(k2, dim_h, dim_out),
        "b2": jnp.zeros((1, dim_out), jnp.float32),
    }


# ------------------------------------------------------------------------ references
def _reference_forward_kernel_path(x, a, dinv, params):
    """Pure-JAX mirror of the exact bf16/f32 rounding points used inside the kernels."""
    f32, bf16 = jnp.float32, jnp.bfloat16
    a_bf = a.astype(bf16)
    dr = dinv[:, None]
    xw = (jnp.dot(x.astype(bf16), params["w1"].astype(bf16),
                  preferred_element_type=f32) * dr).astype(bf16)
    h = jnp.dot(a_bf, xw, preferred_element_type=f32) * dr + params["b1"]
    h = jnp.maximum(h, 0.0).astype(bf16)
    hw = (jnp.dot(h, params["w2"].astype(bf16),
                  preferred_element_type=f32) * dr).astype(bf16)
    h2 = jnp.dot(a_bf, hw, preferred_element_type=f32) * dr + params["b2"]
    return jax.nn.log_softmax(h2, axis=-1)


def _reference_forward_f32(x, a, dinv, params):
    a_hat = dinv[:, None] * a * dinv[None, :]
    h = a_hat @ (x @ params["w1"]) + params["b1"]
    h = jnp.maximum(h, 0.0)                            # eval mode: dropout = identity
    h2 = a_hat @ (h @ params["w2"]) + params["b2"]
    return jax.nn.log_softmax(h2, axis=-1)


# ------------------------------------------------------------------------------ main
if __name__ == "__main__":
    # small synthetic graph: N nodes, E directed edges
    N, E = 512, 2048
    DIM_IN, DIM_H, DIM_OUT = 16, 32, 8

    key = jax.random.PRNGKey(0)
    kx, ke, kp = jax.random.split(key, 3)

    x = jax.random.normal(kx, (N, DIM_IN), jnp.float32)
    edge_index = jax.random.randint(ke, (2, E), 0, N, dtype=jnp.int32)
    params = init_params(kp, DIM_IN, DIM_H, DIM_OUT)

    out = gcn_forward(x, edge_index, params, edge_weight=None, training=False)
    out = jax.block_until_ready(out)
    assert out.shape == (N, DIM_OUT)

    a, dinv = build_graph_operands(edge_index, None, N)

    # tight check against a reference that mirrors the kernel's precision path
    ref_kp = _reference_forward_kernel_path(x, a, dinv, params)
    assert jnp.allclose(out, ref_kp, atol=3e-3, rtol=3e-3), (
        "kernel-path mismatch, max abs err = %g"
        % float(jnp.max(jnp.abs(out - ref_kp))))

    # loose sanity check against plain f32 math (bf16 A / activations in the kernel)
    ref_f32 = _reference_forward_f32(x, a, dinv, params)
    assert jnp.allclose(out, ref_f32, atol=5e-2, rtol=5e-2), (
        "f32-reference mismatch, max abs err = %g"
        % float(jnp.max(jnp.abs(out - ref_f32))))

    # log_softmax rows should sum to ~1 in probability space
    assert jnp.allclose(jnp.sum(jnp.exp(out), axis=-1), 1.0, atol=1e-3)

    print("KERNEL_OK")
</pallas_src>

<mosaic_0001>
module attributes {stable_mosaic.version = 11 : i64} {
  func.func @_gcn_layer1_kernel(%arg0: i32, %arg1: i32, %arg2: memref<1xi32, #tpu.memory_space<smem>>, %arg3: memref<256x512xbf16, #tpu.memory_space<vmem>>, %arg4: memref<256x1xf32, #tpu.memory_space<vmem>>, %arg5: memref<512x1xf32, #tpu.memory_space<vmem>>, %arg6: memref<512x128xbf16, #tpu.memory_space<vmem>>, %arg7: memref<128x128xbf16, #tpu.memory_space<vmem>>, %arg8: memref<1x128xf32, #tpu.memory_space<vmem>>, %arg9: memref<256x128xbf16, #tpu.memory_space<vmem>>, %arg10: memref<256x128xf32, #tpu.memory_space<vmem>>) attributes {dimension_semantics = [#tpu.dimension_semantics<parallel>, #tpu.dimension_semantics<arbitrary>], iteration_bounds = array<i64: 2, 1>, scalar_prefetch = 0 : i64, scratch_operands = 1 : i64, tpu.core_type = #tpu.core_type<tc>, window_params = [{transform_indices = @transform_0, window_bounds = array<i64: 1>}, {transform_indices = @transform_1, window_bounds = array<i64: 256, 512>}, {transform_indices = @transform_2, window_bounds = array<i64: 256, 1>}, {transform_indices = @transform_3, window_bounds = array<i64: 512, 1>}, {transform_indices = @transform_4, window_bounds = array<i64: 512, 128>}, {pipeline_mode = #tpu.pipeline_mode<synchronous>, transform_indices = @transform_5, window_bounds = array<i64: 128, 128>}, {pipeline_mode = #tpu.pipeline_mode<synchronous>, transform_indices = @transform_6, window_bounds = array<i64: 1, 128>}, {transform_indices = @transform_7, window_bounds = array<i64: 256, 128>}]} {
    %c0_i32 = arith.constant 0 : i32
    %0 = arith.cmpi eq, %arg1, %c0_i32 : i32
    %1 = arith.extui %0 : i1 to i32
    %c0_i32_0 = arith.constant 0 : i32
    %2 = arith.cmpi ne, %1, %c0_i32_0 : i32
    scf.if %2 {
      %cst_15 = arith.constant 0.000000e+00 : f32
      %18 = vector.broadcast %cst_15 : f32 to vector<256x128xf32>
      %c0_16 = arith.constant 0 : index
      %c0_17 = arith.constant 0 : index
      %19 = vector.load %arg10[%c0_16, %c0_17] : memref<256x128xf32, #tpu.memory_space<vmem>>, vector<256x128xf32>
      tpu.vector_store %arg10[%c0_16, %c0_17], %18 {strides = array<i32>} : memref<256x128xf32, #tpu.memory_space<vmem>>, vector<256x128xf32>,
    } else {
    }
    %c0 = arith.constant 0 : index
    %c0_1 = arith.constant 0 : index
    %3 = vector.load %arg6[%c0, %c0_1] : memref<512x128xbf16, #tpu.memory_space<vmem>>, vector<512x128xbf16>
    %c0_2 = arith.constant 0 : index
    %c0_3 = arith.constant 0 : index
    %4 = vector.load %arg7[%c0_2, %c0_3] : memref<128x128xbf16, #tpu.memory_space<vmem>>, vector<128x128xbf16>
    %cst = arith.constant dense<0.000000e+00> : vector<512x128xf32>
    %5 = tpu.matmul %3, %4, %cst {dimension_numbers = #tpu.dot_dimension_numbers<[1], [0], [0], [1], [0, 0, 1, 1], [], []>} : vector<512x128xbf16>, vector<128x128xbf16>, vector<512x128xf32> -> vector<512x128xf32>
    %c0_4 = arith.constant 0 : index
    %c0_5 = arith.constant 0 : index
    %6 = vector.load %arg5[%c0_4, %c0_5] : memref<512x1xf32, #tpu.memory_space<vmem>>, vector<512x1xf32>
    %7 = vector.broadcast %6 : vector<512x1xf32> to vector<512x128xf32>
    %8 = arith.mulf %5, %7 : vector<512x128xf32>
    %9 = arith.truncf %8 : vector<512x128xf32> to vector<512x128xbf16>
    %c0_6 = arith.constant 0 : index
    %c0_7 = arith.constant 0 : index
    %10 = vector.load %arg10[%c0_6, %c0_7] : memref<256x128xf32, #tpu.memory_space<vmem>>, vector<256x128xf32>
    %c0_8 = arith.constant 0 : index
    %c0_9 = arith.constant 0 : index
    %11 = vector.load %arg3[%c0_8, %c0_9] : memref<256x512xbf16, #tpu.memory_space<vmem>>, vector<256x512xbf16>
    %cst_10 = arith.constant dense<0.000000e+00> : vector<256x128xf32>
    %12 = tpu.matmul %11, %9, %cst_10 {dimension_numbers = #tpu.dot_dimension_numbers<[1], [0], [0], [1], [0, 0, 1, 1], [], []>} : vector<256x512xbf16>, vector<512x128xbf16>, vector<256x128xf32> -> vector<256x128xf32>
    %13 = arith.addf %10, %12 : vector<256x128xf32>
    %c0_11 = arith.constant 0 : index
    %c0_12 = arith.constant 0 : index
    %14 = vector.load %arg10[%c0_11, %c0_12] : memref<256x128xf32, #tpu.memory_space<vmem>>, vector<256x128xf32>
    tpu.vector_store %arg10[%c0_11, %c0_12], %13 {strides = array<i32>} : memref<256x128xf32, #tpu.memory_space<vmem>>, vector<256x128xf32>,
    %c0_i32_13 = arith.constant 0 : i32
    %15 = arith.cmpi eq, %arg1, %c0_i32_13 : i32
    %16 = arith.extui %15 : i1 to i32
    %c0_i32_14 = arith.constant 0 : i32
    %17 = arith.cmpi ne, %16, %c0_i32_14 : i32
    scf.if %17 {
      %c0_15 = arith.constant 0 : index
      %c0_16 = arith.constant 0 : index
      %18 = vector.load %arg10[%c0_15, %c0_16] : memref<256x128xf32, #tpu.memory_space<vmem>>, vector<256x128xf32>
      %c0_17 = arith.constant 0 : index
      %c0_18 = arith.constant 0 : index
      %19 = vector.load %arg4[%c0_17, %c0_18] : memref<256x1xf32, #tpu.memory_space<vmem>>, vector<256x1xf32>
      %20 = vector.broadcast %19 : vector<256x1xf32> to vector<256x128xf32>
      %21 = arith.mulf %18, %20 : vector<256x128xf32>
      %c0_19 = arith.constant 0 : index
      %c0_20 = arith.constant 0 : index
      %22 = vector.load %arg8[%c0_19, %c0_20] : memref<1x128xf32, #tpu.memory_space<vmem>>, vector<1x128xf32>
      %23 = vector.broadcast %22 : vector<1x128xf32> to vector<256x128xf32>
      %24 = arith.addf %21, %23 : vector<256x128xf32>
      %cst_21 = arith.constant 0.000000e+00 : f32
      %25 = vector.broadcast %cst_21 : f32 to vector<256x128xf32>
      %26 = arith.maximumf %24, %25 : vector<256x128xf32>
      %27 = arith.truncf %26 : vector<256x128xf32> to vector<256x128xbf16>
      %c0_22 = arith.constant 0 : index
      %c0_23 = arith.constant 0 : index
      %28 = vector.load %arg9[%c0_22, %c0_23] : memref<256x128xbf16, #tpu.memory_space<vmem>>, vector<256x128xbf16>
      tpu.vector_store %arg9[%c0_22, %c0_23], %27 {strides = array<i32>} : memref<256x128xbf16, #tpu.memory_space<vmem>>, vector<256x128xbf16>,
    } else {
    }
    return
  }
  func.func @transform_0(%arg0: i32, %arg1: i32) -> i32 {
    %c0_i32 = arith.constant 0 : i32
    %c0_i32_0 = arith.constant 0 : i32
    return %c0_i32 : i32
  }
  func.func @transform_1(%arg0: i32, %arg1: i32) -> (i32, i32) {
    %c0_i32 = arith.constant 0 : i32
    return %arg0, %arg1 : i32, i32
  }
  func.func @transform_2(%arg0: i32, %arg1: i32) -> (i32, i32) {
    %c0_i32 = arith.constant 0 : i32
    %c0_i32_0 = arith.constant 0 : i32
    return %arg0, %c0_i32 : i32, i32
  }
  func.func @transform_3(%arg0: i32, %arg1: i32) -> (i32, i32) {
    %c0_i32 = arith.constant 0 : i32
    %c0_i32_0 = arith.constant 0 : i32
    return %arg1, %c0_i32 : i32, i32
  }
  func.func @transform_4(%arg0: i32, %arg1: i32) -> (i32, i32) {
    %c0_i32 = arith.constant 0 : i32
    %c0_i32_0 = arith.constant 0 : i32
    return %arg1, %c0_i32 : i32, i32
  }
  func.func @transform_5(%arg0: i32, %arg1: i32) -> (i32, i32) {
    %c0_i32 = arith.constant 0 : i32
    %c0_i32_0 = arith.constant 0 : i32
    %c0_i32_1 = arith.constant 0 : i32
    return %c0_i32, %c0_i32_0 : i32, i32
  }
  func.func @transform_6(%arg0: i32, %arg1: i32) -> (i32, i32) {
    %c0_i32 = arith.constant 0 : i32
    %c0_i32_0 = arith.constant 0 : i32
    %c0_i32_1 = arith.constant 0 : i32
    return %c0_i32, %c0_i32_0 : i32, i32
  }
  func.func @transform_7(%arg0: i32, %arg1: i32) -> (i32, i32) {
    %c0_i32 = arith.constant 0 : i32
    %c0_i32_0 = arith.constant 0 : i32
    return %arg0, %c0_i32 : i32, i32
  }
}

</mosaic_0001>

<llo_original>
// kernel: tpu_custom_call.1
$region0: #{tpu_custom_call.1}
  #allocation0 [shape = 'u32[]', space=smem, size = 0x4, offset = 0x4, fixed_abs, tag = 'smem constant byte address 0x4 - core index']
  #allocation1 [shape = 'u32[72,128]{1,0:T(1,128)}', space=vmem, size = 0x9000, scoped, tag = 'internal scratch']
  #allocation2 [shape = 'f32[256,128]{1,0:T(8,128)}', space=vmem, size = 0x20000, scoped, tag = 'scratch operand']
  #allocation3 [shape = 's32[1]{0:T(128)S(6)}', space=smem, size = 0x200, scoped, tag = 'scoped memory for tpu_custom_call.1']
  %s0 = inlined_call_operand.<no memory space> [shape: s32[1], index: 0, kind: input, shape index: {}]
  %s1 = inlined_call_operand.vmem [shape: bf16[512,512], index: 1, kind: input, shape index: {}]
  %s2 = inlined_call_operand.vmem [shape: f32[512,1], index: 2, kind: input, shape index: {}]
  %s3 = inlined_call_operand.vmem [shape: f32[512,1], index: 3, kind: input, shape index: {}]
  %s4 = inlined_call_operand.hbm [shape: bf16[512,128], index: 4, kind: input, shape index: {}]
  %s5 = inlined_call_operand.hbm [shape: bf16[128,128], index: 5, kind: input, shape index: {}]
  %s6 = inlined_call_operand.vmem [shape: f32[1,128], index: 6, kind: input, shape index: {}]
  %s7 = inlined_call_operand.hbm [shape: bf16[512,128], index: 7, kind: output, shape index: {}]
  %s8 = sld [smem:[#allocation0]]
  $region77: #{tpu_custom_call.1} parent=0
    _
  %s10 = ssub.s32 1, %s8
  %s11 = scalar_select 0, %s10, %s8
  %12 = sst [smem:[#allocation3]] %s0
  $region1: #{tpu_custom_call.1} parent=0
    #allocation4 [shape = 'u8[131072]{0}', space=vmem, size = 0x20000, scoped, tag = 'input window, operand 4, single buffered']
    #allocation5 [shape = 's32[2]{0}', space=sflag, size = 0x8, scoped, tag = 'scoped memory for tpu_custom_call.1']
    #allocation6 [shape = 's32[2]{0}', space=sflag, size = 0x8, scoped, tag = 'scoped memory for tpu_custom_call.1']
    #allocation7 [shape = 'u8[32768]{0}', space=vmem, size = 0x8000, scoped, tag = 'input window, operand 5, single buffered']
    #allocation8 [shape = 's32[1]{0}', space=sflag, size = 0x4, scoped, tag = 'scoped memory for tpu_custom_call.1']
    #allocation9 [shape = 'u8[131072]{0}', space=vmem, size = 0x20000, scoped, tag = 'output window, operand 0']
    %13 = vsyncpa [#allocation5], 0
    %14 = vsyncpa [#allocation8], 0
    %15 = vsyncpa [#allocation6], 0
    %s16 = scalar_lea.sflag [#allocation6], 1
    %17 = vsyncpa %s16, 0
    loop: start=0, step=1, limit=4
    $region2: #{tpu_custom_call.1} parent=1 // loop_pre_header
      _
    $region3: #{tpu_custom_call.1} parent=1 // loop_header
      %s19 = sphi 0, %s23
      %p20 = scmp.ge.s32.totalorder %s19, 4
      %s26 = sphi 0, %s38
      %s27 = sphi 0, %s34
      %s28 = sphi 0, %s26
      %s29 = sphi 0, %s27
      %s30 = sphi 0, %s28
      %s31 = sphi 0, %s29
      %s39 = sphi 0, %s39
      %s41 = sphi 0, %s39
      %s42 = sphi 0, %s41
      %s56 = sphi 0, %s42
      %s64 = sphi 0, %s66
      %s67 = sphi 0, %s64
      %s68 = sphi 0, %s67
      %s84 = sphi 0, %s68
      %s90 = sphi 0, %s92
      %s93 = sphi 0, %s90
      %s94 = sphi 0, %s93
      %s110 = sphi 0, %s94
      %s116 = sphi 0, %s118
      %s119 = sphi 0, %s116
      %s120 = sphi 0, %s119
      %s136 = sphi 0, %s120
      %s142 = sphi 0, %s144
      %s145 = sphi 0, %s142
      %s146 = sphi 0, %s145
      %s162 = sphi 0, %s146
      %s166 = sphi 0, %s166
      %s168 = sphi 0, %s166
      %s169 = sphi 0, %s168
      %s183 = sphi 0, %s169
      %s187 = sphi 0, %s187
      %s189 = sphi 0, %s187
      %s190 = sphi 0, %s189
      %s204 = sphi 0, %s190
      %s210 = sphi 0, %s212
      %s213 = sphi 0, %s210
      %s214 = sphi 0, %s213
      %s230 = sphi 0, %s214
    $region4: #{tpu_custom_call.1} parent=1 // loop_header_branch
      %22 = sbr.rel (%p20) target = $region8
    $region5: #{tpu_custom_call.1} parent=1 // loop_body
      %s24 = ssub.s32 %s19, 1
      %s25 = ssub.s32 %s19, 2
      %s32 = sadd.s32 1, %s27
      %p33 = scmp.ge.s32.totalorder %s32, 1
      %s34 = scalar_select %p33, 0, %s32
      %s35 = sadd.s32 1, %s26
      %s36 = scalar_select %p33, %s35, %s26
      %p37 = scmp.ge.s32.totalorder %s36, 2
      %s38 = scalar_select %p37, 0, %s36
      %s40 = sadd.s32 %s39, 1
      %p43 = scmp.eq.s32.totalorder %s19, 1
      %p44 = scmp.ne.s32.totalorder %s39, %s41
      %p45 = scmp.eq.s32.totalorder %s19, 0
      %p46 = por %p44, %p45
      %p47 = scmp.ne.s32.totalorder %s39, %s41
      %p48 = scmp.eq.s32.totalorder %s24, 1
      %p49 = por %p47, %p48
      %p50 = scmp.ne.s32.totalorder %s41, %s42
      %p51 = scmp.eq.s32.totalorder %s24, 0
      %p52 = por %p50, %p51
      %p53 = scmp.ne.s32.totalorder %s41, %s42
      %p54 = scmp.eq.s32.totalorder %s25, 1
      %p55 = por %p53, %p54
      %p57 = scmp.ne.s32.totalorder %s42, %s56
      %p58 = scmp.eq.s32.totalorder %s25, 0
      %p59 = por %p57, %p58
      %s60 = ssub.s32 %s26, %s38
      %s61 = ssub.s32 %s27, %s34
      %s62 = sor.u32 %s60, %s61
      %p63 = scmp.eq.s32.totalorder %s62, 0
      %s65 = sadd.s32 %s64, 1
      %s66 = scalar_select %p63, %s64, %s65
      %p69 = pneg %p63
      %p70 = scmp.eq.s32.totalorder %s19, 1
      %p71 = por %p69, %p70
      %p72 = scmp.ne.s32.totalorder %s64, %s67
      %p73 = scmp.eq.s32.totalorder %s19, 0
      %p74 = por %p72, %p73
      %p75 = scmp.ne.s32.totalorder %s64, %s67
      %p76 = scmp.eq.s32.totalorder %s24, 1
      %p77 = por %p75, %p76
      %p78 = scmp.ne.s32.totalorder %s67, %s68
      %p79 = scmp.eq.s32.totalorder %s24, 0
      %p80 = por %p78, %p79
      %p81 = scmp.ne.s32.totalorder %s67, %s68
      %p82 = scmp.eq.s32.totalorder %s25, 1
      %p83 = por %p81, %p82
      %p85 = scmp.ne.s32.totalorder %s68, %s84
      %p86 = scmp.eq.s32.totalorder %s25, 0
      %p87 = por %p85, %p86
      %s88 = ssub.s32 %s26, %s38
      %p89 = scmp.eq.s32.totalorder %s88, 0
      %s91 = sadd.s32 %s90, 1
      %s92 = scalar_select %p89, %s90, %s91
      %p95 = pneg %p89
      %p96 = scmp.eq.s32.totalorder %s19, 1
      %p97 = por %p95, %p96
      %p98 = scmp.ne.s32.totalorder %s90, %s93
      %p99 = scmp.eq.s32.totalorder %s19, 0
      %p100 = por %p98, %p99
      %p101 = scmp.ne.s32.totalorder %s90, %s93
      %p102 = scmp.eq.s32.totalorder %s24, 1
      %p103 = por %p101, %p102
      %p104 = scmp.ne.s32.totalorder %s93, %s94
      %p105 = scmp.eq.s32.totalorder %s24, 0
      %p106 = por %p104, %p105
      %p107 = scmp.ne.s32.totalorder %s93, %s94
      %p108 = scmp.eq.s32.totalorder %s25, 1
      %p109 = por %p107, %p108
      %p111 = scmp.ne.s32.totalorder %s94, %s110
      %p112 = scmp.eq.s32.totalorder %s25, 0
      %p113 = por %p111, %p112
      %s114 = ssub.s32 %s27, %s34
      %p115 = scmp.eq.s32.totalorder %s114, 0
      %s117 = sadd.s32 %s116, 1
      %s118 = scalar_select %p115, %s116, %s117
      %p121 = pneg %p115
      %p122 = scmp.eq.s32.totalorder %s19, 1
      %p123 = por %p121, %p122
      %p124 = scmp.ne.s32.totalorder %s116, %s119
      %p125 = scmp.eq.s32.totalorder %s19, 0
      %p126 = por %p124, %p125
      %p127 = scmp.ne.s32.totalorder %s116, %s119
      %p128 = scmp.eq.s32.totalorder %s24, 1
      %p129 = por %p127, %p128
      %p130 = scmp.ne.s32.totalorder %s119, %s120
      %p131 = scmp.eq.s32.totalorder %s24, 0
      %p132 = por %p130, %p131
      %p133 = scmp.ne.s32.totalorder %s119, %s120
      %p134 = scmp.eq.s32.totalorder %s25, 1
      %p135 = por %p133, %p134
      %p137 = scmp.ne.s32.totalorder %s120, %s136
      %p138 = scmp.eq.s32.totalorder %s25, 0
      %p139 = por %p137, %p138
      %s140 = ssub.s32 %s27, %s34
      %p141 = scmp.eq.s32.totalorder %s140, 0
      %s143 = sadd.s32 %s142, 1
      %s144 = scalar_select %p141, %s142, %s143
      %p147 = pneg %p141
      %p148 = scmp.eq.s32.totalorder %s19, 1
      %p149 = por %p147, %p148
      %p150 = scmp.ne.s32.totalorder %s142, %s145
      %p151 = scmp.eq.s32.totalorder %s19, 0
      %p152 = por %p150, %p151
      %p153 = scmp.ne.s32.totalorder %s142, %s145
      %p154 = scmp.eq.s32.totalorder %s24, 1
      %p155 = por %p153, %p154
      %p156 = scmp.ne.s32.totalorder %s145, %s146
      %p157 = scmp.eq.s32.totalorder %s24, 0
      %p158 = por %p156, %p157
      %p159 = scmp.ne.s32.totalorder %s145, %s146
      %p160 = scmp.eq.s32.totalorder %s25, 1
      %p161 = por %p159, %p160
      %p163 = scmp.ne.s32.totalorder %s146, %s162
      %p164 = scmp.eq.s32.totalorder %s25, 0
      %p165 = por %p163, %p164
      %s167 = sadd.s32 %s166, 1
      %p170 = scmp.eq.s32.totalorder %s19, 1
      %p171 = scmp.ne.s32.totalorder %s166, %s168
      %p172 = scmp.eq.s32.totalorder %s19, 0
      %p173 = por %p171, %p172
      %p174 = scmp.ne.s32.totalorder %s166, %s168
      %p175 = scmp.eq.s32.totalorder %s24, 1
      %p176 = por %p174, %p175
      %p177 = scmp.ne.s32.totalorder %s168, %s169
      %p178 = scmp.eq.s32.totalorder %s24, 0
      %p179 = por %p177, %p178
      %p180 = scmp.ne.s32.totalorder %s168, %s169
      %p181 = scmp.eq.s32.totalorder %s25, 1
      %p182 = por %p180, %p181
      %p184 = scmp.ne.s32.totalorder %s169, %s183
      %p185 = scmp.eq.s32.totalorder %s25, 0
      %p186 = por %p184, %p185
      %s188 = sadd.s32 %s187, 1
      %p191 = scmp.eq.s32.totalorder %s19, 1
      %p192 = scmp.ne.s32.totalorder %s187, %s189
      %p193 = scmp.eq.s32.totalorder %s19, 0
      %p194 = por %p192, %p193
      %p195 = scmp.ne.s32.totalorder %s187, %s189
      %p196 = scmp.eq.s32.totalorder %s24, 1
      %p197 = por %p195, %p196
      %p198 = scmp.ne.s32.totalorder %s189, %s190
      %p199 = scmp.eq.s32.totalorder %s24, 0
      %p200 = por %p198, %p199
      %p201 = scmp.ne.s32.totalorder %s189, %s190
      %p202 = scmp.eq.s32.totalorder %s25, 1
      %p203 = por %p201, %p202
      %p205 = scmp.ne.s32.totalorder %s190, %s204
      %p206 = scmp.eq.s32.totalorder %s25, 0
      %p207 = por %p205, %p206
      %s208 = ssub.s32 %s26, %s38
      %p209 = scmp.eq.s32.totalorder %s208, 0
      %s211 = sadd.s32 %s210, 1
      %s212 = scalar_select %p209, %s210, %s211
      %p215 = pneg %p209
      %p216 = scmp.eq.s32.totalorder %s19, 1
      %p217 = por %p215, %p216
      %p218 = scmp.ne.s32.totalorder %s210, %s213
      %p219 = scmp.eq.s32.totalorder %s19, 0
      %p220 = por %p218, %p219
      %p221 = scmp.ne.s32.totalorder %s210, %s213
      %p222 = scmp.eq.s32.totalorder %s24, 1
      %p223 = por %p221, %p222
      %p224 = scmp.ne.s32.totalorder %s213, %s214
      %p225 = scmp.eq.s32.totalorder %s24, 0
      %p226 = por %p224, %p225
      %p227 = scmp.ne.s32.totalorder %s213, %s214
      %p228 = scmp.eq.s32.totalorder %s25, 1
      %p229 = por %p227, %p228
      %p231 = scmp.ne.s32.totalorder %s214, %s230
      %p232 = scmp.eq.s32.totalorder %s25, 0
      %p233 = por %p231, %p232
      %p234 = scmp.le.s32.totalorder 1, %s19
      %p235 = scmp.lt.s32.totalorder %s19, 3
      %p236 = pnand %p234, %p235
      %p237 = pneg %p236
      // Predicated region
      $region9: #{tpu_custom_call.1} parent=5 // pred_check
        _
      $region10: #{tpu_custom_call.1} parent=5 // pred_check_branch
        %239 = sbr.rel (%p236) target = $region12
      $region11: #{tpu_custom_call.1} parent=5 // pred_region
        %s240 = ssub.s32 %s19, 1
        // Predicated region
        $region13: #{tpu_custom_call.1} parent=11 // pred_check
          %p241 = pneg %p52
        $region14: #{tpu_custom_call.1} parent=11 // pred_check_branch
          %243 = sbr.rel (%p241) target = $region16
        $region15: #{tpu_custom_call.1} parent=11 // pred_region
          _
        $region16: #{tpu_custom_call.1} parent=11 // pred_fallthru
          _
        // Predicated region
        $region17: #{tpu_custom_call.1} parent=11 // pred_check
          %p244 = pneg %p132
        $region18: #{tpu_custom_call.1} parent=11 // pred_check_branch
          %246 = sbr.rel (%p244) target = $region20
        $region19: #{tpu_custom_call.1} parent=11 // pred_region
          %s247 = smul.u32 64, %s29
          %p248 = scmp.lt.s32.totalorder %s247, 63
          %s249 = scalar_select %p248, %s247, 63
          %s250 = smul.addr %s249, 8
          %s251 = scalar_lea.vmem %s3, %s250
          %s252 = smul.u32 64, %s29
        $region20: #{tpu_custom_call.1} parent=11 // pred_fallthru
          _
        // Predicated region
        $region21: #{tpu_custom_call.1} parent=11 // pred_check
          %p253 = pneg %p158
        $region22: #{tpu_custom_call.1} parent=11 // pred_check_branch
          %255 = sbr.rel (%p253) target = $region24
        $region23: #{tpu_custom_call.1} parent=11 // pred_region
          %s256 = smul.u32 64, %s29
          %258 = vsyncadd [#allocation5], 0
          %s259 = smul.addr %s256, 4
          %s260 = scalar_lea.hbm %s4, %s259
          %s261 = sshll.u32 %s260, 4
          %s262 = int_to_ptr.hbm [resolvable:$true] %s261
          %s263 = sshll.u32 [#allocation4], 4
          %s264 = int_to_ptr.vmem [resolvable:$true] %s263
          %269 = dma.hbm_to_vmem [thread:$0]  %s262, 4096, %s264, [#allocation5], 64, 64, 4
        $region24: #{tpu_custom_call.1} parent=11 // pred_fallthru
          _
        // Predicated region
        $region25: #{tpu_custom_call.1} parent=11 // pred_check
          %p270 = pneg %p179
        $region26: #{tpu_custom_call.1} parent=11 // pred_check_branch
          %272 = sbr.rel (%p270) target = $region28
        $region27: #{tpu_custom_call.1} parent=11 // pred_region
          %274 = vsyncadd [#allocation8], 0
          %s275 = sshll.u32 %s5, 4
          %s276 = int_to_ptr.hbm [resolvable:$true] %s275
          %s277 = sshll.u32 [#allocation7], 4
          %s278 = int_to_ptr.vmem [resolvable:$true] %s277
          %283 = dma.hbm_to_vmem [thread:$0]  %s276, 1024, %s278, [#allocation8], 64, 64, 4
        $region28: #{tpu_custom_call.1} parent=11 // pred_fallthru
          _
        // Predicated region
        $region29: #{tpu_custom_call.1} parent=11 // pred_check
          %p284 = pneg %p200
        $region30: #{tpu_custom_call.1} parent=11 // pred_check_branch
          %286 = sbr.rel (%p284) target = $region32
        $region31: #{tpu_custom_call.1} parent=11 // pred_region
          _
        $region32: #{tpu_custom_call.1} parent=11 // pred_fallthru
          _
      $region12: #{tpu_custom_call.1} parent=5 // pred_fallthru
        _
      %p287 = scmp.lt.s32.totalorder %s19, 2
      // Predicated region
      $region33: #{tpu_custom_call.1} parent=5 // pred_check
        %p288 = pneg %p287
      $region34: #{tpu_custom_call.1} parent=5 // pred_check_branch
        %290 = sbr.rel (%p288) target = $region36
      $region35: #{tpu_custom_call.1} parent=5 // pred_region
        // Predicated region
        $region37: #{tpu_custom_call.1} parent=35 // pred_check
          %p291 = pneg %p74
        $region38: #{tpu_custom_call.1} parent=35 // pred_check_branch
          %293 = sbr.rel (%p291) target = $region40
        $region39: #{tpu_custom_call.1} parent=35 // pred_region
          %s294 = smul.u32 32, %s26
          %s295 = smul.u32 4, %s27
          %p296 = scmp.lt.s32.totalorder %s294, 63
          %s297 = scalar_select %p296, %s294, 63
          %p298 = scmp.lt.s32.totalorder %s295, 3
          %s299 = scalar_select %p298, %s295, 3
          %s300 = smul.addr %s297, 4
          %s301 = sadd.s32 %s299, %s300
          %s302 = smul.addr %s301, 4
          %s303 = scalar_lea.vmem %s1, %s302
          %s304 = smul.u32 32, %s26
          %s305 = smul.u32 4, %s27
        $region40: #{tpu_custom_call.1} parent=35 // pred_fallthru
          _
        // Predicated region
        $region41: #{tpu_custom_call.1} parent=35 // pred_check
          %p306 = pneg %p100
        $region42: #{tpu_custom_call.1} parent=35 // pred_check_branch
          %308 = sbr.rel (%p306) target = $region44
        $region43: #{tpu_custom_call.1} parent=35 // pred_region
          %s309 = smul.u32 32, %s26
          %p310 = scmp.lt.s32.totalorder %s309, 63
          %s311 = scalar_select %p310, %s309, 63
          %s312 = smul.addr %s311, 8
          %s313 = scalar_lea.vmem %s2, %s312
          %s314 = smul.u32 32, %s26
        $region44: #{tpu_custom_call.1} parent=35 // pred_fallthru
          _
      $region36: #{tpu_custom_call.1} parent=5 // pred_fallthru
        _
      %p315 = scmp.le.s32.totalorder 1, %s19
      %p316 = scmp.lt.s32.totalorder %s19, 3
      %p317 = pnand %p315, %p316
      %p318 = pneg %p317
      // Predicated region
      $region45: #{tpu_custom_call.1} parent=5 // pred_check
        _
      $region46: #{tpu_custom_call.1} parent=5 // pred_check_branch
        %320 = sbr.rel (%p317) target = $region48
      $region47: #{tpu_custom_call.1} parent=5 // pred_region
        %s321 = ssub.s32 %s19, 1
        // Predicated region
        $region49: #{tpu_custom_call.1} parent=47 // pred_check
          %p322 = pneg %p158
        $region50: #{tpu_custom_call.1} parent=47 // pred_check_branch
          %324 = sbr.rel (%p322) target = $region52
        $region51: #{tpu_custom_call.1} parent=47 // pred_region
          %326 = dma.done [#allocation5], 4096
        $region52: #{tpu_custom_call.1} parent=47 // pred_fallthru
          _
        // Predicated region
        $region53: #{tpu_custom_call.1} parent=47 // pred_check
          %p327 = pneg %p179
        $region54: #{tpu_custom_call.1} parent=47 // pred_check_branch
          %329 = sbr.rel (%p327) target = $region56
        $region55: #{tpu_custom_call.1} parent=47 // pred_region
          %331 = dma.done [#allocation8], 1024
        $region56: #{tpu_custom_call.1} parent=47 // pred_fallthru
          _
        %p332 = pneg %p52
        %p333 = pneg %p49
        %s334 = smul.u32 32, %s28
        %s335 = smul.u32 4, %s29
        %p336 = scmp.lt.s32.totalorder %s334, 63
        %s337 = scalar_select %p336, %s334, 63
        %p338 = scmp.lt.s32.totalorder %s335, 3
        %s339 = scalar_select %p338, %s335, 3
        %s340 = smul.addr %s337, 4
        %s341 = sadd.s32 %s339, %s340
        %s342 = smul.addr %s341, 4
        %s343 = scalar_lea.vmem %s1, %s342
        %p344 = pneg %p80
        %p345 = pneg %p77
        %s346 = smul.u32 32, %s28
        %p347 = scmp.lt.s32.totalorder %s346, 63
        %s348 = scalar_select %p347, %s346, 63
        %s349 = smul.addr %s348, 8
        %s350 = scalar_lea.vmem %s2, %s349
        %p351 = pneg %p106
        %p352 = pneg %p103
        %s353 = smul.u32 64, %s29
        %p354 = scmp.lt.s32.totalorder %s353, 63
        %s355 = scalar_select %p354, %s353, 63
        %s356 = smul.addr %s355, 8
        %s357 = scalar_lea.vmem %s3, %s356
        %p358 = pneg %p132
        %p359 = pneg %p129
        %p360 = pneg %p158
        %p361 = pneg %p155
        %p362 = pneg %p179
        %p363 = pneg %p176
        %p364 = pneg %p200
        %p365 = pneg %p197
        %p366 = pneg %p226
        %p367 = pneg %p223
        %s368 = sand.u32 %s213, 1
        %s369 = scalar_lea.sflag [#allocation6], %s368
        %s370 = sand.u32 %s213, 1
        %s371 = smul.addr %s370, 128
        %s372 = scalar_lea.vmem [#allocation9], %s371
        %s373 = smul.u32 32, %s28
        %s374 = smul.u32 4, %s29
        %p375 = scmp.lt.s32.totalorder %s373, 63
        %s376 = scalar_select %p375, %s373, 63
        %p377 = scmp.lt.s32.totalorder %s374, 3
        %s378 = scalar_select %p377, %s374, 3
        %s379 = smul.addr %s376, 4
        %s380 = sadd.s32 %s378, %s379
        %s381 = smul.addr %s380, 4
        %s382 = scalar_lea.vmem %s1, %s381
        %s383 = smul.u32 32, %s28
        %s384 = smul.u32 4, %s29
        %s385 = smul.u32 32, %s28
        %p386 = scmp.lt.s32.totalorder %s385, 63
        %s387 = scalar_select %p386, %s385, 63
        %s388 = smul.addr %s387, 8
        %s389 = scalar_lea.vmem %s2, %s388
        %s390 = smul.u32 32, %s28
        %s391 = smul.u32 64, %s29
        %p392 = scmp.lt.s32.totalorder %s391, 63
        %s393 = scalar_select %p392, %s391, 63
        %s394 = smul.addr %s393, 8
        %s395 = scalar_lea.vmem %s3, %s394
        %s396 = smul.u32 64, %s29
        %s397 = smul.u32 64, %s29
        %s398 = smul.u32 32, %s28
        %p399 = scmp.eq.s32.totalorder %s29, 0
        // Predicated region
        $region57: #{tpu_custom_call.1} parent=47 // pred_check
          %p400 = pneg %p399
        $region58: #{tpu_custom_call.1} parent=47 // pred_check_branch
          %402 = sbr.rel (%p400) target = $region60
        $region59: #{tpu_custom_call.1} parent=47 // pred_region
          %403 = vst [vmem:[#allocation2] sm:$0xff] 0.0
          %404 = vst [vmem:[#allocation2 + $0x8] sm:$0xff] 0.0
          %405 = vst [vmem:[#allocation2 + $0x10] sm:$0xff] 0.0
          %406 = vst [vmem:[#allocation2 + $0x18] sm:$0xff] 0.0
          %407 = vst [vmem:[#allocation2 + $0x20] sm:$0xff] 0.0
          %408 = vst [vmem:[#allocation2 + $0x28] sm:$0xff] 0.0
          %409 = vst [vmem:[#allocation2 + $0x30] sm:$0xff] 0.0
          %410 = vst [vmem:[#allocation2 + $0x38] sm:$0xff] 0.0
          %411 = vst [vmem:[#allocation2 + $0x40] sm:$0xff] 0.0
          %412 = vst [vmem:[#allocation2 + $0x48] sm:$0xff] 0.0
          %413 = vst [vmem:[#allocation2 + $0x50] sm:$0xff] 0.0
          %414 = vst [vmem:[#allocation2 + $0x58] sm:$0xff] 0.0
          %415 = vst [vmem:[#allocation2 + $0x60] sm:$0xff] 0.0
          %416 = vst [vmem:[#allocation2 + $0x68] sm:$0xff] 0.0
          %417 = vst [vmem:[#allocation2 + $0x70] sm:$0xff] 0.0
          %418 = vst [vmem:[#allocation2 + $0x78] sm:$0xff] 0.0
          %419 = vst [vmem:[#allocation2 + $0x80] sm:$0xff] 0.0
          %420 = vst [vmem:[#allocation2 + $0x88] sm:$0xff] 0.0
          %421 = vst [vmem:[#allocation2 + $0x90] sm:$0xff] 0.0
          %422 = vst [vmem:[#allocation2 + $0x98] sm:$0xff] 0.0
          %423 = vst [vmem:[#allocation2 + $0xa0] sm:$0xff] 0.0
          %424 = vst [vmem:[#allocation2 + $0xa8] sm:$0xff] 0.0
          %425 = vst [vmem:[#allocation2 + $0xb0] sm:$0xff] 0.0
          %426 = vst [vmem:[#allocation2 + $0xb8] sm:$0xff] 0.0
          %427 = vst [vmem:[#allocation2 + $0xc0] sm:$0xff] 0.0
          %428 = vst [vmem:[#allocation2 + $0xc8] sm:$0xff] 0.0
          %429 = vst [vmem:[#allocation2 + $0xd0] sm:$0xff] 0.0
          %430 = vst [vmem:[#allocation2 + $0xd8] sm:$0xff] 0.0
          %431 = vst [vmem:[#allocation2 + $0xe0] sm:$0xff] 0.0
          %432 = vst [vmem:[#allocation2 + $0xe8] sm:$0xff] 0.0
          %433 = vst [vmem:[#allocation2 + $0xf0] sm:$0xff] 0.0
          %434 = vst [vmem:[#allocation2 + $0xf8] sm:$0xff] 0.0
        $region60: #{tpu_custom_call.1} parent=47 // pred_fallthru
          _
        %v435 = vld [vmem:[#allocation4] sm:$0xf]
        %v436 = vld [vmem:[#allocation4 + $0x4] sm:$0xf]
        %v437 = vld [vmem:[#allocation4 + $0x8] sm:$0xf]
        %v438 = vld [vmem:[#allocation4 + $0xc] sm:$0xf]
        %v439 = vld [vmem:[#allocation4 + $0x10] sm:$0xf]
        %v440 = vld [vmem:[#allocation4 + $0x14] sm:$0xf]
        %v441 = vld [vmem:[#allocation4 + $0x18] sm:$0xf]
        %v442 = vld [vmem:[#allocation4 + $0x1c] sm:$0xf]
        %v443 = vld [vmem:[#allocation4 + $0x20] sm:$0xf]
        %v444 = vld [vmem:[#allocation4 + $0x24] sm:$0xf]
        %v445 = vld [vmem:[#allocation4 + $0x28] sm:$0xf]
        %v446 = vld [vmem:[#allocation4 + $0x2c] sm:$0xf]
        %v447 = vld [vmem:[#allocation4 + $0x30] sm:$0xf]
        %v448 = vld [vmem:[#allocation4 + $0x34] sm:$0xf]
        %v449 = vld [vmem:[#allocation4 + $0x38] sm:$0xf]
        %v450 = vld [vmem:[#allocation4 + $0x3c] sm:$0xf]
        %v451 = vld [vmem:[#allocation4 + $0x40] sm:$0xf]
        %v452 = vld [vmem:[#allocation4 + $0x44] sm:$0xf]
        %v453 = vld [vmem:[#allocation4 + $0x48] sm:$0xf]
        %v454 = vld [vmem:[#allocation4 + $0x4c] sm:$0xf]
        %v455 = vld [vmem:[#allocation4 + $0x50] sm:$0xf]
        %v456 = vld [vmem:[#allocation4 + $0x54] sm:$0xf]
        %v457 = vld [vmem:[#allocation4 + $0x58] sm:$0xf]
        %v458 = vld [vmem:[#allocation4 + $0x5c] sm:$0xf]
        %v459 = vld [vmem:[#allocation4 + $0x60] sm:$0xf]
        %v460 = vld [vmem:[#allocation4 + $0x64] sm:$0xf]
        %v461 = vld [vmem:[#allocation4 + $0x68] sm:$0xf]
        %v462 = vld [vmem:[#allocation4 + $0x6c] sm:$0xf]
        %v463 = vld [vmem:[#allocation4 + $0x70] sm:$0xf]
        %v464 = vld [vmem:[#allocation4 + $0x74] sm:$0xf]
        %v465 = vld [vmem:[#allocation4 + $0x78] sm:$0xf]
        %v466 = vld [vmem:[#allocation4 + $0x7c] sm:$0xf]
        %v467 = vld [vmem:[#allocation4 + $0x80] sm:$0xf]
        %v468 = vld [vmem:[#allocation4 + $0x84] sm:$0xf]
        %v469 = vld [vmem:[#allocation4 + $0x88] sm:$0xf]
        %v470 = vld [vmem:[#allocation4 + $0x8c] sm:$0xf]
        %v471 = vld [vmem:[#allocation4 + $0x90] sm:$0xf]
        %v472 = vld [vmem:[#allocation4 + $0x94] sm:$0xf]
        %v473 = vld [vmem:[#allocation4 + $0x98] sm:$0xf]
        %v474 = vld [vmem:[#allocation4 + $0x9c] sm:$0xf]
        %v475 = vld [vmem:[#allocation4 + $0xa0] sm:$0xf]
        %v476 = vld [vmem:[#allocation4 + $0xa4] sm:$0xf]
        %v477 = vld [vmem:[#allocation4 + $0xa8] sm:$0xf]
        %v478 = vld [vmem:[#allocation4 + $0xac] sm:$0xf]
        %v479 = vld [vmem:[#allocation4 + $0xb0] sm:$0xf]
        %v480 = vld [vmem:[#allocation4 + $0xb4] sm:$0xf]
        %v481 = vld [vmem:[#allocation4 + $0xb8] sm:$0xf]
        %v482 = vld [vmem:[#allocation4 + $0xbc] sm:$0xf]
        %v483 = vld [vmem:[#allocation4 + $0xc0] sm:$0xf]
        %v484 = vld [vmem:[#allocation4 + $0xc4] sm:$0xf]
        %v485 = vld [vmem:[#allocation4 + $0xc8] sm:$0xf]
        %v486 = vld [vmem:[#allocation4 + $0xcc] sm:$0xf]
        %v487 = vld [vmem:[#allocation4 + $0xd0] sm:$0xf]
        %v488 = vld [vmem:[#allocation4 + $0xd4] sm:$0xf]
        %v489 = vld [vmem:[#allocation4 + $0xd8] sm:$0xf]
        %v490 = vld [vmem:[#allocation4 + $0xdc] sm:$0xf]
        %v491 = vld [vmem:[#allocation4 + $0xe0] sm:$0xf]
        %v492 = vld [vmem:[#allocation4 + $0xe4] sm:$0xf]
        %v493 = vld [vmem:[#allocation4 + $0xe8] sm:$0xf]
        %v494 = vld [vmem:[#allocation4 + $0xec] sm:$0xf]
        %v495 = vld [vmem:[#allocation4 + $0xf0] sm:$0xf]
        %v496 = vld [vmem:[#allocation4 + $0xf4] sm:$0xf]
        %v497 = vld [vmem:[#allocation4 + $0xf8] sm:$0xf]
        %v498 = vld [vmem:[#allocation4 + $0xfc] sm:$0xf]
        %v499 = vld [vmem:[#allocation7] sm:$0xf]
        %v500 = vld [vmem:[#allocation7 + $0x4] sm:$0xf]
        %v501 = vld [vmem:[#allocation7 + $0x8] sm:$0xf]
        %v502 = vld [vmem:[#allocation7 + $0xc] sm:$0xf]
        %v503 = vld [vmem:[#allocation7 + $0x10] sm:$0xf]
        %v504 = vld [vmem:[#allocation7 + $0x14] sm:$0xf]
        %v505 = vld [vmem:[#allocation7 + $0x18] sm:$0xf]
        %v506 = vld [vmem:[#allocation7 + $0x1c] sm:$0xf]
        %v507 = vld [vmem:[#allocation7 + $0x20] sm:$0xf]
        %v508 = vld [vmem:[#allocation7 + $0x24] sm:$0xf]
        %v509 = vld [vmem:[#allocation7 + $0x28] sm:$0xf]
        %v510 = vld [vmem:[#allocation7 + $0x2c] sm:$0xf]
        %v511 = vld [vmem:[#allocation7 + $0x30] sm:$0xf]
        %v512 = vld [vmem:[#allocation7 + $0x34] sm:$0xf]
        %v513 = vld [vmem:[#allocation7 + $0x38] sm:$0xf]
        %v514 = vld [vmem:[#allocation7 + $0x3c] sm:$0xf]
        %v579 = vunpack.c.l.b16 %v435
        %v580 = vunpack.c.l.b16 %v436
        %v581 = vunpack.c.l.b16 %v437
        %v582 = vunpack.c.l.b16 %v438
        %v583 = vunpack.c.l.b16 %v439
        %v584 = vunpack.c.l.b16 %v440
        %v585 = vunpack.c.l.b16 %v441
        %v586 = vunpack.c.l.b16 %v442
        %v587 = vunpack.c.l.b16 %v443
        %v588 = vunpack.c.l.b16 %v444
        %v589 = vunpack.c.l.b16 %v445
        %v590 = vunpack.c.l.b16 %v446
        %v591 = vunpack.c.l.b16 %v447
        %v592 = vunpack.c.l.b16 %v448
        %v593 = vunpack.c.l.b16 %v449
        %v594 = vunpack.c.l.b16 %v450
        %v595 = vunpack.c.l.b16 %v451
        %v596 = vunpack.c.l.b16 %v452
        %v597 = vunpack.c.l.b16 %v453
        %v598 = vunpack.c.l.b16 %v454
        %v599 = vunpack.c.l.b16 %v455
        %v600 = vunpack.c.l.b16 %v456
        %v601 = vunpack.c.l.b16 %v457
        %v602 = vunpack.c.l.b16 %v458
        %v603 = vunpack.c.l.b16 %v459
        %v604 = vunpack.c.l.b16 %v460
        %v605 = vunpack.c.l.b16 %v461
        %v606 = vunpack.c.l.b16 %v462
        %v607 = vunpack.c.l.b16 %v463
        %v608 = vunpack.c.l.b16 %v464
        %v609 = vunpack.c.l.b16 %v465
        %v610 = vunpack.c.l.b16 %v466
        %v611 = vunpack.c.l.b16 %v467
        %v612 = vunpack.c.l.b16 %v468
        %v613 = vunpack.c.l.b16 %v469
        %v614 = vunpack.c.l.b16 %v470
        %v615 = vunpack.c.l.b16 %v471
        %v616 = vunpack.c.l.b16 %v472
        %v617 = vunpack.c.l.b16 %v473
        %v618 = vunpack.c.l.b16 %v474
        %v619 = vunpack.c.l.b16 %v475
        %v620 = vunpack.c.l.b16 %v476
        %v621 = vunpack.c.l.b16 %v477
        %v622 = vunpack.c.l.b16 %v478
        %v623 = vunpack.c.l.b16 %v479
        %v624 = vunpack.c.l.b16 %v480
        %v625 = vunpack.c.l.b16 %v481
        %v626 = vunpack.c.l.b16 %v482
        %v627 = vunpack.c.l.b16 %v483
        %v628 = vunpack.c.l.b16 %v484
        %v629 = vunpack.c.l.b16 %v485
        %v630 = vunpack.c.l.b16 %v486
        %v631 = vunpack.c.l.b16 %v487
        %v632 = vunpack.c.l.b16 %v488
        %v633 = vunpack.c.l.b16 %v489
        %v634 = vunpack.c.l.b16 %v490
        %v635 = vunpack.c.l.b16 %v491
        %v636 = vunpack.c.l.b16 %v492
        %v637 = vunpack.c.l.b16 %v493
        %v638 = vunpack.c.l.b16 %v494
        %v639 = vunpack.c.l.b16 %v495
        %v640 = vunpack.c.l.b16 %v496
        %v641 = vunpack.c.l.b16 %v497
        %v642 = vunpack.c.l.b16 %v498
        %v643 = vpack.c.b16 %v580, %v579
        %v644 = vpack.c.b16 %v582, %v581
        %v645 = vpack.c.b16 %v584, %v583
        %v646 = vpack.c.b16 %v586, %v585
        %v647 = vpack.c.b16 %v588, %v587
        %v648 = vpack.c.b16 %v590, %v589
        %v649 = vpack.c.b16 %v592, %v591
        %v650 = vpack.c.b16 %v594, %v593
        %v651 = vpack.c.b16 %v596, %v595
        %v652 = vpack.c.b16 %v598, %v597
        %v653 = vpack.c.b16 %v600, %v599
        %v654 = vpack.c.b16 %v602, %v601
        %v655 = vpack.c.b16 %v604, %v603
        %v656 = vpack.c.b16 %v606, %v605
        %v657 = vpack.c.b16 %v608, %v607
        %v658 = vpack.c.b16 %v610, %v609
        %v659 = vpack.c.b16 %v612, %v611
        %v660 = vpack.c.b16 %v614, %v613
        %v661 = vpack.c.b16 %v616, %v615
        %v662 = vpack.c.b16 %v618, %v617
        %v663 = vpack.c.b16 %v620, %v619
        %v664 = vpack.c.b16 %v622, %v621
        %v665 = vpack.c.b16 %v624, %v623
        %v666 = vpack.c.b16 %v626, %v625
        %v667 = vpack.c.b16 %v628, %v627
        %v668 = vpack.c.b16 %v630, %v629
        %v669 = vpack.c.b16 %v632, %v631
        %v670 = vpack.c.b16 %v634, %v633
        %v671 = vpack.c.b16 %v636, %v635
        %v672 = vpack.c.b16 %v638, %v637
        %v673 = vpack.c.b16 %v640, %v639
        %v674 = vpack.c.b16 %v642, %v641
        %v723 = vunpack.c.l.b16 %v499
        %v724 = vunpack.c.l.b16 %v500
        %v725 = vunpack.c.l.b16 %v501
        %v726 = vunpack.c.l.b16 %v502
        %v727 = vunpack.c.l.b16 %v503
        %v728 = vunpack.c.l.b16 %v504
        %v729 = vunpack.c.l.b16 %v505
        %v730 = vunpack.c.l.b16 %v506
        %v731 = vunpack.c.l.b16 %v507
        %v732 = vunpack.c.l.b16 %v508
        %v733 = vunpack.c.l.b16 %v509
        %v734 = vunpack.c.l.b16 %v510
        %v735 = vunpack.c.l.b16 %v511
        %v736 = vunpack.c.l.b16 %v512
        %v737 = vunpack.c.l.b16 %v513
        %v738 = vunpack.c.l.b16 %v514
        %v739 = vpack.c.b16 %v724, %v723
        %v740 = vpack.c.b16 %v726, %v725
        %v741 = vpack.c.b16 %v728, %v727
        %v742 = vpack.c.b16 %v730, %v729
        %v743 = vpack.c.b16 %v732, %v731
        %v744 = vpack.c.b16 %v734, %v733
        %v745 = vpack.c.b16 %v736, %v735
        %v746 = vpack.c.b16 %v738, %v737
        %755 = vmatpush.bf16.msra.mxu0 %v746
        %756 = vmatpush.bf16.msra.mxu0 %v745
        %757 = vmatpush.bf16.msra.mxu0 %v744
        %758 = vmatpush.bf16.msra.mxu0 %v743
        %759 = vmatpush.bf16.msra.mxu0 %v742
        %760 = vmatpush.bf16.msra.mxu0 %v741
        %761 = vmatpush.bf16.msra.mxu0 %v740
        %762 = vmatpush.bf16.msra.mxu0 %v739
        %763 = vmatmul.bf16.gmra.mxu0 %v643
        %v764 = vpop.f32.mrf.mxu0
        %v765 = vadd.f32 0.0, %v764
        %v766 = vpop.f32.mrf.mxu0
        %v767 = vadd.f32 0.0, %v766
        %768 = vmatmul.bf16.gmra.mxu0 %v644
        %v769 = vpop.f32.mrf.mxu0
        %v770 = vadd.f32 0.0, %v769
        %v771 = vpop.f32.mrf.mxu0
        %v772 = vadd.f32 0.0, %v771
        %773 = vmatmul.bf16.gmra.mxu0 %v645
        %v774 = vpop.f32.mrf.mxu0
        %v775 = vadd.f32 0.0, %v774
        %v776 = vpop.f32.mrf.mxu0
        %v777 = vadd.f32 0.0, %v776
        %778 = vmatmul.bf16.gmra.mxu0 %v646
        %v779 = vpop.f32.mrf.mxu0
        %v780 = vadd.f32 0.0, %v779
        %v781 = vpop.f32.mrf.mxu0
        %v782 = vadd.f32 0.0, %v781
        %783 = vmatmul.bf16.gmra.mxu0 %v647
        %v784 = vpop.f32.mrf.mxu0
        %v785 = vadd.f32 0.0, %v784
        %v786 = vpop.f32.mrf.mxu0
        %v787 = vadd.f32 0.0, %v786
        %788 = vmatmul.bf16.gmra.mxu0 %v648
        %v789 = vpop.f32.mrf.mxu0
        %v790 = vadd.f32 0.0, %v789
        %v791 = vpop.f32.mrf.mxu0
        %v792 = vadd.f32 0.0, %v791
        %793 = vmatmul.bf16.gmra.mxu0 %v649
        %v794 = vpop.f32.mrf.mxu0
        %v795 = vadd.f32 0.0, %v794
        %v796 = vpop.f32.mrf.mxu0
        %v797 = vadd.f32 0.0, %v796
        %798 = vmatmul.bf16.gmra.mxu0 %v650
        %v799 = vpop.f32.mrf.mxu0
        %v800 = vadd.f32 0.0, %v799
        %v801 = vpop.f32.mrf.mxu0
        %v802 = vadd.f32 0.0, %v801
        %803 = vmatmul.bf16.gmra.mxu0 %v651
        %v804 = vpop.f32.mrf.mxu0
        %v805 = vadd.f32 0.0, %v804
        %v806 = vpop.f32.mrf.mxu0
        %v807 = vadd.f32 0.0, %v806
        %808 = vmatmul.bf16.gmra.mxu0 %v652
        %v809 = vpop.f32.mrf.mxu0
        %v810 = vadd.f32 0.0, %v809
        %v811 = vpop.f32.mrf.mxu0
        %v812 = vadd.f32 0.0, %v811
        %813 = vmatmul.bf16.gmra.mxu0 %v653
        %v814 = vpop.f32.mrf.mxu0
        %v815 = vadd.f32 0.0, %v814
        %v816 = vpop.f32.mrf.mxu0
        %v817 = vadd.f32 0.0, %v816
        %818 = vmatmul.bf16.gmra.mxu0 %v654
        %v819 = vpop.f32.mrf.mxu0
        %v820 = vadd.f32 0.0, %v819
        %v821 = vpop.f32.mrf.mxu0
        %v822 = vadd.f32 0.0, %v821
        %823 = vmatmul.bf16.gmra.mxu0 %v655
        %v824 = vpop.f32.mrf.mxu0
        %v825 = vadd.f32 0.0, %v824
        %v826 = vpop.f32.mrf.mxu0
        %v827 = vadd.f32 0.0, %v826
        %828 = vmatmul.bf16.gmra.mxu0 %v656
        %v829 = vpop.f32.mrf.mxu0
        %v830 = vadd.f32 0.0, %v829
        %v831 = vpop.f32.mrf.mxu0
        %v832 = vadd.f32 0.0, %v831
        %833 = vmatmul.bf16.gmra.mxu0 %v657
        %v834 = vpop.f32.mrf.mxu0
        %v835 = vadd.f32 0.0, %v834
        %v836 = vpop.f32.mrf.mxu0
        %v837 = vadd.f32 0.0, %v836
        %838 = vmatmul.bf16.gmra.mxu0 %v658
        %v839 = vpop.f32.mrf.mxu0
        %v840 = vadd.f32 0.0, %v839
        %v841 = vpop.f32.mrf.mxu0
        %v842 = vadd.f32 0.0, %v841
        %843 = vmatmul.bf16.gmra.mxu0 %v659
        %v844 = vpop.f32.mrf.mxu0
        %v845 = vadd.f32 0.0, %v844
        %v846 = vpop.f32.mrf.mxu0
        %v847 = vadd.f32 0.0, %v846
        %848 = vmatmul.bf16.gmra.mxu0 %v660
        %v849 = vpop.f32.mrf.mxu0
        %v850 = vadd.f32 0.0, %v849
        %v851 = vpop.f32.mrf.mxu0
        %v852 = vadd.f32 0.0, %v851
        %853 = vmatmul.bf16.gmra.mxu0 %v661
        %v854 = vpop.f32.mrf.mxu0
        %v855 = vadd.f32 0.0, %v854
        %v856 = vpop.f32.mrf.mxu0
        %v857 = vadd.f32 0.0, %v856
        %858 = vmatmul.bf16.gmra.mxu0 %v662
        %v859 = vpop.f32.mrf.mxu0
        %v860 = vadd.f32 0.0, %v859
        %v861 = vpop.f32.mrf.mxu0
        %v862 = vadd.f32 0.0, %v861
        %863 = vmatmul.bf16.gmra.mxu0 %v663
        %v864 = vpop.f32.mrf.mxu0
        %v865 = vadd.f32 0.0, %v864
        %v866 = vpop.f32.mrf.mxu0
        %v867 = vadd.f32 0.0, %v866
        %868 = vmatmul.bf16.gmra.mxu0 %v664
        %v869 = vpop.f32.mrf.mxu0
        %v870 = vadd.f32 0.0, %v869
        %v871 = vpop.f32.mrf.mxu0
        %v872 = vadd.f32 0.0, %v871
        %873 = vmatmul.bf16.gmra.mxu0 %v665
        %v874 = vpop.f32.mrf.mxu0
        %v875 = vadd.f32 0.0, %v874
        %v876 = vpop.f32.mrf.mxu0
        %v877 = vadd.f32 0.0, %v876
        %878 = vmatmul.bf16.gmra.mxu0 %v666
        %v879 = vpop.f32.mrf.mxu0
        %v880 = vadd.f32 0.0, %v879
        %v881 = vpop.f32.mrf.mxu0
        %v882 = vadd.f32 0.0, %v881
        %883 = vmatmul.bf16.gmra.mxu0 %v667
        %v884 = vpop.f32.mrf.mxu0
        %v885 = vadd.f32 0.0, %v884
        %v886 = vpop.f32.mrf.mxu0
        %v887 = vadd.f32 0.0, %v886
        %888 = vmatmul.bf16.gmra.mxu0 %v668
        %v889 = vpop.f32.mrf.mxu0
        %v890 = vadd.f32 0.0, %v889
        %v891 = vpop.f32.mrf.mxu0
        %v892 = vadd.f32 0.0, %v891
        %893 = vmatmul.bf16.gmra.mxu0 %v669
        %v894 = vpop.f32.mrf.mxu0
        %v895 = vadd.f32 0.0, %v894
        %v896 = vpop.f32.mrf.mxu0
        %v897 = vadd.f32 0.0, %v896
        %898 = vmatmul.bf16.gmra.mxu0 %v670
        %v899 = vpop.f32.mrf.mxu0
        %v900 = vadd.f32 0.0, %v899
        %v901 = vpop.f32.mrf.mxu0
        %v902 = vadd.f32 0.0, %v901
        %903 = vmatmul.bf16.gmra.mxu0 %v671
        %v904 = vpop.f32.mrf.mxu0
        %v905 = vadd.f32 0.0, %v904
        %v906 = vpop.f32.mrf.mxu0
        %v907 = vadd.f32 0.0, %v906
        %908 = vmatmul.bf16.gmra.mxu0 %v672
        %v909 = vpop.f32.mrf.mxu0
        %v910 = vadd.f32 0.0, %v909
        %v911 = vpop.f32.mrf.mxu0
        %v912 = vadd.f32 0.0, %v911
        %913 = vmatmul.bf16.gmra.mxu0 %v673
        %v914 = vpop.f32.mrf.mxu0
        %v915 = vadd.f32 0.0, %v914
        %v916 = vpop.f32.mrf.mxu0
        %v917 = vadd.f32 0.0, %v916
        %918 = vmatmul.bf16.gmra.mxu0 %v674
        %v919 = vpop.f32.mrf.mxu0
        %v920 = vadd.f32 0.0, %v919
        %v921 = vpop.f32.mrf.mxu0
        %v922 = vadd.f32 0.0, %v921
        %923 = vdwg.mxu0
        %v924 = vld [vmem:[%s395] sm:$0xff]
        %v925 = vld [vmem:[%s395 + $0x8] sm:$0xff]
        %v926 = vld [vmem:[%s395 + $0x10] sm:$0xff]
        %v927 = vld [vmem:[%s395 + $0x18] sm:$0xff]
        %v928 = vld [vmem:[%s395 + $0x20] sm:$0xff]
        %v929 = vld [vmem:[%s395 + $0x28] sm:$0xff]
        %v930 = vld [vmem:[%s395 + $0x30] sm:$0xff]
        %v931 = vld [vmem:[%s395 + $0x38] sm:$0xff]
        %v932 = vld [vmem:[%s395 + $0x40] sm:$0xff]
        %v933 = vld [vmem:[%s395 + $0x48] sm:$0xff]
        %v934 = vld [vmem:[%s395 + $0x50] sm:$0xff]
        %v935 = vld [vmem:[%s395 + $0x58] sm:$0xff]
        %v936 = vld [vmem:[%s395 + $0x60] sm:$0xff]
        %v937 = vld [vmem:[%s395 + $0x68] sm:$0xff]
        %v938 = vld [vmem:[%s395 + $0x70] sm:$0xff]
        %v939 = vld [vmem:[%s395 + $0x78] sm:$0xff]
        %v940 = vld [vmem:[%s395 + $0x80] sm:$0xff]
        %v941 = vld [vmem:[%s395 + $0x88] sm:$0xff]
        %v942 = vld [vmem:[%s395 + $0x90] sm:$0xff]
        %v943 = vld [vmem:[%s395 + $0x98] sm:$0xff]
        %v944 = vld [vmem:[%s395 + $0xa0] sm:$0xff]
        %v945 = vld [vmem:[%s395 + $0xa8] sm:$0xff]
        %v946 = vld [vmem:[%s395 + $0xb0] sm:$0xff]
        %v947 = vld [vmem:[%s395 + $0xb8] sm:$0xff]
        %v948 = vld [vmem:[%s395 + $0xc0] sm:$0xff]
        %v949 = vld [vmem:[%s395 + $0xc8] sm:$0xff]
        %v950 = vld [vmem:[%s395 + $0xd0] sm:$0xff]
        %v951 = vld [vmem:[%s395 + $0xd8] sm:$0xff]
        %v952 = vld [vmem:[%s395 + $0xe0] sm:$0xff]
        %v953 = vld [vmem:[%s395 + $0xe8] sm:$0xff]
        %v954 = vld [vmem:[%s395 + $0xf0] sm:$0xff]
        %v955 = vld [vmem:[%s395 + $0xf8] sm:$0xff]
        %v956 = vld [vmem:[%s395 + $0x100] sm:$0xff]
        %v957 = vld [vmem:[%s395 + $0x108] sm:$0xff]
        %v958 = vld [vmem:[%s395 + $0x110] sm:$0xff]
        %v959 = vld [vmem:[%s395 + $0x118] sm:$0xff]
        %v960 = vld [vmem:[%s395 + $0x120] sm:$0xff]
        %v961 = vld [vmem:[%s395 + $0x128] sm:$0xff]
        %v962 = vld [vmem:[%s395 + $0x130] sm:$0xff]
        %v963 = vld [vmem:[%s395 + $0x138] sm:$0xff]
        %v964 = vld [vmem:[%s395 + $0x140] sm:$0xff]
        %v965 = vld [vmem:[%s395 + $0x148] sm:$0xff]
        %v966 = vld [vmem:[%s395 + $0x150] sm:$0xff]
        %v967 = vld [vmem:[%s395 + $0x158] sm:$0xff]
        %v968 = vld [vmem:[%s395 + $0x160] sm:$0xff]
        %v969 = vld [vmem:[%s395 + $0x168] sm:$0xff]
        %v970 = vld [vmem:[%s395 + $0x170] sm:$0xff]
        %v971 = vld [vmem:[%s395 + $0x178] sm:$0xff]
        %v972 = vld [vmem:[%s395 + $0x180] sm:$0xff]
        %v973 = vld [vmem:[%s395 + $0x188] sm:$0xff]
        %v974 = vld [vmem:[%s395 + $0x190] sm:$0xff]
        %v975 = vld [vmem:[%s395 + $0x198] sm:$0xff]
        %v976 = vld [vmem:[%s395 + $0x1a0] sm:$0xff]
        %v977 = vld [vmem:[%s395 + $0x1a8] sm:$0xff]
        %v978 = vld [vmem:[%s395 + $0x1b0] sm:$0xff]
        %v979 = vld [vmem:[%s395 + $0x1b8] sm:$0xff]
        %v980 = vld [vmem:[%s395 + $0x1c0] sm:$0xff]
        %v981 = vld [vmem:[%s395 + $0x1c8] sm:$0xff]
        %v982 = vld [vmem:[%s395 + $0x1d0] sm:$0xff]
        %v983 = vld [vmem:[%s395 + $0x1d8] sm:$0xff]
        %v984 = vld [vmem:[%s395 + $0x1e0] sm:$0xff]
        %v985 = vld [vmem:[%s395 + $0x1e8] sm:$0xff]
        %v986 = vld [vmem:[%s395 + $0x1f0] sm:$0xff]
        %v987 = vld [vmem:[%s395 + $0x1f8] sm:$0xff]
        %989 = vset.pattern.permute.xlu0 0
        %990 = vperm.xlu0 %989, %v924
        %v991 = vpop.permute.xlu0 %990
        %994 = vset.pattern.permute.xlu0 0
        %995 = vperm.xlu0 %994, %v925
        %v996 = vpop.permute.xlu0 %995
        %999 = vset.pattern.permute.xlu0 0
        %1000 = vperm.xlu0 %999, %v926
        %v1001 = vpop.permute.xlu0 %1000
        %1004 = vset.pattern.permute.xlu0 0
        %1005 = vperm.xlu0 %1004, %v927
        %v1006 = vpop.permute.xlu0 %1005
        %1009 = vset.pattern.permute.xlu0 0
        %1010 = vperm.xlu0 %1009, %v928
        %v1011 = vpop.permute.xlu0 %1010
        %1014 = vset.pattern.permute.xlu0 0
        %1015 = vperm.xlu0 %1014, %v929
        %v1016 = vpop.permute.xlu0 %1015
        %1019 = vset.pattern.permute.xlu0 0
        %1020 = vperm.xlu0 %1019, %v930
        %v1021 = vpop.permute.xlu0 %1020
        %1024 = vset.pattern.permute.xlu0 0
        %1025 = vperm.xlu0 %1024, %v931
        %v1026 = vpop.permute.xlu0 %1025
        %1029 = vset.pattern.permute.xlu0 0
        %1030 = vperm.xlu0 %1029, %v932
        %v1031 = vpop.permute.xlu0 %1030
        %1034 = vset.pattern.permute.xlu0 0
        %1035 = vperm.xlu0 %1034, %v933
        %v1036 = vpop.permute.xlu0 %1035
        %1039 = vset.pattern.permute.xlu0 0
        %1040 = vperm.xlu0 %1039, %v934
        %v1041 = vpop.permute.xlu0 %1040
        %1044 = vset.pattern.permute.xlu0 0
        %1045 = vperm.xlu0 %1044, %v935
        %v1046 = vpop.permute.xlu0 %1045
        %1049 = vset.pattern.permute.xlu0 0
        %1050 = vperm.xlu0 %1049, %v936
        %v1051 = vpop.permute.xlu0 %1050
        %1054 = vset.pattern.permute.xlu0 0
        %1055 = vperm.xlu0 %1054, %v937
        %v1056 = vpop.permute.xlu0 %1055
        %1059 = vset.pattern.permute.xlu0 0
        %1060 = vperm.xlu0 %1059, %v938
        %v1061 = vpop.permute.xlu0 %1060
        %1064 = vset.pattern.permute.xlu0 0
        %1065 = vperm.xlu0 %1064, %v939
        %v1066 = vpop.permute.xlu0 %1065
        %1069 = vset.pattern.permute.xlu0 0
        %1070 = vperm.xlu0 %1069, %v940
        %v1071 = vpop.permute.xlu0 %1070
        %1074 = vset.pattern.permute.xlu0 0
        %1075 = vperm.xlu0 %1074, %v941
        %v1076 = vpop.permute.xlu0 %1075
        %1079 = vset.pattern.permute.xlu0 0
        %1080 = vperm.xlu0 %1079, %v942
        %v1081 = vpop.permute.xlu0 %1080
        %1084 = vset.pattern.permute.xlu0 0
        %1085 = vperm.xlu0 %1084, %v943
        %v1086 = vpop.permute.xlu0 %1085
        %1089 = vset.pattern.permute.xlu0 0
        %1090 = vperm.xlu0 %1089, %v944
        %v1091 = vpop.permute.xlu0 %1090
        %1094 = vset.pattern.permute.xlu0 0
        %1095 = vperm.xlu0 %1094, %v945
        %v1096 = vpop.permute.xlu0 %1095
        %1099 = vset.pattern.permute.xlu0 0
        %1100 = vperm.xlu0 %1099, %v946
        %v1101 = vpop.permute.xlu0 %1100
        %1104 = vset.pattern.permute.xlu0 0
        %1105 = vperm.xlu0 %1104, %v947
        %v1106 = vpop.permute.xlu0 %1105
        %1109 = vset.pattern.permute.xlu0 0
        %1110 = vperm.xlu0 %1109, %v948
        %v1111 = vpop.permute.xlu0 %1110
        %1114 = vset.pattern.permute.xlu0 0
        %1115 = vperm.xlu0 %1114, %v949
        %v1116 = vpop.permute.xlu0 %1115
        %1119 = vset.pattern.permute.xlu0 0
        %1120 = vperm.xlu0 %1119, %v950
        %v1121 = vpop.permute.xlu0 %1120
        %1124 = vset.pattern.permute.xlu0 0
        %1125 = vperm.xlu0 %1124, %v951
        %v1126 = vpop.permute.xlu0 %1125
        %1129 = vset.pattern.permute.xlu0 0
        %1130 = vperm.xlu0 %1129, %v952
        %v1131 = vpop.permute.xlu0 %1130
        %1134 = vset.pattern.permute.xlu0 0
        %1135 = vperm.xlu0 %1134, %v953
        %v1136 = vpop.permute.xlu0 %1135
        %1139 = vset.pattern.permute.xlu0 0
        %1140 = vperm.xlu0 %1139, %v954
        %v1141 = vpop.permute.xlu0 %1140
        %1144 = vset.pattern.permute.xlu0 0
        %1145 = vperm.xlu0 %1144, %v955
        %v1146 = vpop.permute.xlu0 %1145
        %1149 = vset.pattern.permute.xlu0 0
        %1150 = vperm.xlu0 %1149, %v956
        %v1151 = vpop.permute.xlu0 %1150
        %1154 = vset.pattern.permute.xlu0 0
        %1155 = vperm.xlu0 %1154, %v957
        %v1156 = vpop.permute.xlu0 %1155
        %1159 = vset.pattern.permute.xlu0 0
        %1160 = vperm.xlu0 %1159, %v958
        %v1161 = vpop.permute.xlu0 %1160
        %1164 = vset.pattern.permute.xlu0 0
        %1165 = vperm.xlu0 %1164, %v959
        %v1166 = vpop.permute.xlu0 %1165
        %1169 = vset.pattern.permute.xlu0 0
        %1170 = vperm.xlu0 %1169, %v960
        %v1171 = vpop.permute.xlu0 %1170
        %1174 = vset.pattern.permute.xlu0 0
        %1175 = vperm.xlu0 %1174, %v961
        %v1176 = vpop.permute.xlu0 %1175
        %1179 = vset.pattern.permute.xlu0 0
        %1180 = vperm.xlu0 %1179, %v962
        %v1181 = vpop.permute.xlu0 %1180
        %1184 = vset.pattern.permute.xlu0 0
        %1185 = vperm.xlu0 %1184, %v963
        %v1186 = vpop.permute.xlu0 %1185
        %1189 = vset.pattern.permute.xlu0 0
        %1190 = vperm.xlu0 %1189, %v964
        %v1191 = vpop.permute.xlu0 %1190
        %1194 = vset.pattern.permute.xlu0 0
        %1195 = vperm.xlu0 %1194, %v965
        %v1196 = vpop.permute.xlu0 %1195
        %1199 = vset.pattern.permute.xlu0 0
        %1200 = vperm.xlu0 %1199, %v966
        %v1201 = vpop.permute.xlu0 %1200
        %1204 = vset.pattern.permute.xlu0 0
        %1205 = vperm.xlu0 %1204, %v967
        %v1206 = vpop.permute.xlu0 %1205
        %1209 = vset.pattern.permute.xlu0 0
        %1210 = vperm.xlu0 %1209, %v968
        %v1211 = vpop.permute.xlu0 %1210
        %1214 = vset.pattern.permute.xlu0 0
        %1215 = vperm.xlu0 %1214, %v969
        %v1216 = vpop.permute.xlu0 %1215
        %1219 = vset.pattern.permute.xlu0 0
        %1220 = vperm.xlu0 %1219, %v970
        %v1221 = vpop.permute.xlu0 %1220
        %1224 = vset.pattern.permute.xlu0 0
        %1225 = vperm.xlu0 %1224, %v971
        %v1226 = vpop.permute.xlu0 %1225
        %1229 = vset.pattern.permute.xlu0 0
        %1230 = vperm.xlu0 %1229, %v972
        %v1231 = vpop.permute.xlu0 %1230
        %1234 = vset.pattern.permute.xlu0 0
        %1235 = vperm.xlu0 %1234, %v973
        %v1236 = vpop.permute.xlu0 %1235
        %1239 = vset.pattern.permute.xlu0 0
        %1240 = vperm.xlu0 %1239, %v974
        %v1241 = vpop.permute.xlu0 %1240
        %1244 = vset.pattern.permute.xlu0 0
        %1245 = vperm.xlu0 %1244, %v975
        %v1246 = vpop.permute.xlu0 %1245
        %1249 = vset.pattern.permute.xlu0 0
        %1250 = vperm.xlu0 %1249, %v976
        %v1251 = vpop.permute.xlu0 %1250
        %1254 = vset.pattern.permute.xlu0 0
        %1255 = vperm.xlu0 %1254, %v977
        %v1256 = vpop.permute.xlu0 %1255
        %1259 = vset.pattern.permute.xlu0 0
        %1260 = vperm.xlu0 %1259, %v978
        %v1261 = vpop.permute.xlu0 %1260
        %1264 = vset.pattern.permute.xlu0 0
        %1265 = vperm.xlu0 %1264, %v979
        %v1266 = vpop.permute.xlu0 %1265
        %1269 = vset.pattern.permute.xlu0 0
        %1270 = vperm.xlu0 %1269, %v980
        %v1271 = vpop.permute.xlu0 %1270
        %1274 = vset.pattern.permute.xlu0 0
        %1275 = vperm.xlu0 %1274, %v981
        %v1276 = vpop.permute.xlu0 %1275
        %1279 = vset.pattern.permute.xlu0 0
        %1280 = vperm.xlu0 %1279, %v982
        %v1281 = vpop.permute.xlu0 %1280
        %1284 = vset.pattern.permute.xlu0 0
        %1285 = vperm.xlu0 %1284, %v983
        %v1286 = vpop.permute.xlu0 %1285
        %1289 = vset.pattern.permute.xlu0 0
        %1290 = vperm.xlu0 %1289, %v984
        %v1291 = vpop.permute.xlu0 %1290
        %1294 = vset.pattern.permute.xlu0 0
        %1295 = vperm.xlu0 %1294, %v985
        %v1296 = vpop.permute.xlu0 %1295
        %1299 = vset.pattern.permute.xlu0 0
        %1300 = vperm.xlu0 %1299, %v986
        %v1301 = vpop.permute.xlu0 %1300
        %1304 = vset.pattern.permute.xlu0 0
        %1305 = vperm.xlu0 %1304, %v987
        %v1306 = vpop.permute.xlu0 %1305
        %v1308 = vmul.f32 %v765, %v991
        %v1309 = vmul.f32 %v767, %v996
        %v1310 = vmul.f32 %v770, %v1001
        %v1311 = vmul.f32 %v772, %v1006
        %v1312 = vmul.f32 %v775, %v1011
        %v1313 = vmul.f32 %v777, %v1016
        %v1314 = vmul.f32 %v780, %v1021
        %v1315 = vmul.f32 %v782, %v1026
        %v1316 = vmul.f32 %v785, %v1031
        %v1317 = vmul.f32 %v787, %v1036
        %v1318 = vmul.f32 %v790, %v1041
        %v1319 = vmul.f32 %v792, %v1046
        %v1320 = vmul.f32 %v795, %v1051
        %v1321 = vmul.f32 %v797, %v1056
        %v1322 = vmul.f32 %v800, %v1061
        %v1323 = vmul.f32 %v802, %v1066
        %v1324 = vmul.f32 %v805, %v1071
        %v1325 = vmul.f32 %v807, %v1076
        %v1326 = vmul.f32 %v810, %v1081
        %v1327 = vmul.f32 %v812, %v1086
        %v1328 = vmul.f32 %v815, %v1091
        %v1329 = vmul.f32 %v817, %v1096
        %v1330 = vmul.f32 %v820, %v1101
        %v1331 = vmul.f32 %v822, %v1106
        %v1332 = vmul.f32 %v825, %v1111
        %v1333 = vmul.f32 %v827, %v1116
        %v1334 = vmul.f32 %v830, %v1121
        %v1335 = vmul.f32 %v832, %v1126
        %v1336 = vmul.f32 %v835, %v1131
        %v1337 = vmul.f32 %v837, %v1136
        %v1338 = vmul.f32 %v840, %v1141
        %v1339 = vmul.f32 %v842, %v1146
        %v1340 = vmul.f32 %v845, %v1151
        %v1341 = vmul.f32 %v847, %v1156
        %v1342 = vmul.f32 %v850, %v1161
        %v1343 = vmul.f32 %v852, %v1166
        %v1344 = vmul.f32 %v855, %v1171
        %v1345 = vmul.f32 %v857, %v1176
        %v1346 = vmul.f32 %v860, %v1181
        %v1347 = vmul.f32 %v862, %v1186
        %v1348 = vmul.f32 %v865, %v1191
        %v1349 = vmul.f32 %v867, %v1196
        %v1350 = vmul.f32 %v870, %v1201
        %v1351 = vmul.f32 %v872, %v1206
        %v1352 = vmul.f32 %v875, %v1211
        %v1353 = vmul.f32 %v877, %v1216
        %v1354 = vmul.f32 %v880, %v1221
        %v1355 = vmul.f32 %v882, %v1226
        %v1356 = vmul.f32 %v885, %v1231
        %v1357 = vmul.f32 %v887, %v1236
        %v1358 = vmul.f32 %v890, %v1241
        %v1359 = vmul.f32 %v892, %v1246
        %v1360 = vmul.f32 %v895, %v1251
        %v1361 = vmul.f32 %v897, %v1256
        %v1362 = vmul.f32 %v900, %v1261
        %v1363 = vmul.f32 %v902, %v1266
        %v1364 = vmul.f32 %v905, %v1271
        %v1365 = vmul.f32 %v907, %v1276
        %v1366 = vmul.f32 %v910, %v1281
        %v1367 = vmul.f32 %v912, %v1286
        %v1368 = vmul.f32 %v915, %v1291
        %v1369 = vmul.f32 %v917, %v1296
        %v1370 = vmul.f32 %v920, %v1301
        %v1371 = vmul.f32 %v922, %v1306
        %v1372 = vpack.c.bf16 %v1309, %v1308
        %v1373 = vpack.c.bf16 %v1311, %v1310
        %v1374 = vpack.c.bf16 %v1313, %v1312
        %v1375 = vpack.c.bf16 %v1315, %v1314
        %v1376 = vpack.c.bf16 %v1317, %v1316
        %v1377 = vpack.c.bf16 %v1319, %v1318
        %v1378 = vpack.c.bf16 %v1321, %v1320
        %v1379 = vpack.c.bf16 %v1323, %v1322
        %v1380 = vpack.c.bf16 %v1325, %v1324
        %v1381 = vpack.c.bf16 %v1327, %v1326
        %v1382 = vpack.c.bf16 %v1329, %v1328
        %v1383 = vpack.c.bf16 %v1331, %v1330
        %v1384 = vpack.c.bf16 %v1333, %v1332
        %v1385 = vpack.c.bf16 %v1335, %v1334
        %v1386 = vpack.c.bf16 %v1337, %v1336
        %v1387 = vpack.c.bf16 %v1339, %v1338
        %v1388 = vpack.c.bf16 %v1341, %v1340
        %v1389 = vpack.c.bf16 %v1343, %v1342
        %v1390 = vpack.c.bf16 %v1345, %v1344
        %v1391 = vpack.c.bf16 %v1347, %v1346
        %v1392 = vpack.c.bf16 %v1349, %v1348
        %v1393 = vpack.c.bf16 %v1351, %v1350
        %v1394 = vpack.c.bf16 %v1353, %v1352
        %v1395 = vpack.c.bf16 %v1355, %v1354
        %v1396 = vpack.c.bf16 %v1357, %v1356
        %v1397 = vpack.c.bf16 %v1359, %v1358
        %v1398 = vpack.c.bf16 %v1361, %v1360
        %v1399 = vpack.c.bf16 %v1363, %v1362
        %v1400 = vpack.c.bf16 %v1365, %v1364
        %v1401 = vpack.c.bf16 %v1367, %v1366
        %v1402 = vpack.c.bf16 %v1369, %v1368
        %v1403 = vpack.c.bf16 %v1371, %v1370
        %v1404 = vld [vmem:[#allocation2] sm:$0xff]
        %v1405 = vld [vmem:[#allocation2 + $0x8] sm:$0xff]
        %v1406 = vld [vmem:[#allocation2 + $0x10] sm:$0xff]
        %v1407 = vld [vmem:[#allocation2 + $0x18] sm:$0xff]
        %v1408 = vld [vmem:[#allocation2 + $0x20] sm:$0xff]
        %v1409 = vld [vmem:[#allocation2 + $0x28] sm:$0xff]
        %v1410 = vld [vmem:[#allocation2 + $0x30] sm:$0xff]
        %v1411 = vld [vmem:[#allocation2 + $0x38] sm:$0xff]
        %v1412 = vld [vmem:[#allocation2 + $0x40] sm:$0xff]
        %v1413 = vld [vmem:[#allocation2 + $0x48] sm:$0xff]
        %v1414 = vld [vmem:[#allocation2 + $0x50] sm:$0xff]
        %v1415 = vld [vmem:[#allocation2 + $0x58] sm:$0xff]
        %v1416 = vld [vmem:[#allocation2 + $0x60] sm:$0xff]
        %v1417 = vld [vmem:[#allocation2 + $0x68] sm:$0xff]
        %v1418 = vld [vmem:[#allocation2 + $0x70] sm:$0xff]
        %v1419 = vld [vmem:[#allocation2 + $0x78] sm:$0xff]
        %v1420 = vld [vmem:[#allocation2 + $0x80] sm:$0xff]
        %v1421 = vld [vmem:[#allocation2 + $0x88] sm:$0xff]
        %v1422 = vld [vmem:[#allocation2 + $0x90] sm:$0xff]
        %v1423 = vld [vmem:[#allocation2 + $0x98] sm:$0xff]
        %v1424 = vld [vmem:[#allocation2 + $0xa0] sm:$0xff]
        %v1425 = vld [vmem:[#allocation2 + $0xa8] sm:$0xff]
        %v1426 = vld [vmem:[#allocation2 + $0xb0] sm:$0xff]
        %v1427 = vld [vmem:[#allocation2 + $0xb8] sm:$0xff]
        %v1428 = vld [vmem:[#allocation2 + $0xc0] sm:$0xff]
        %v1429 = vld [vmem:[#allocation2 + $0xc8] sm:$0xff]
        %v1430 = vld [vmem:[#allocation2 + $0xd0] sm:$0xff]
        %v1431 = vld [vmem:[#allocation2 + $0xd8] sm:$0xff]
        %v1432 = vld [vmem:[#allocation2 + $0xe0] sm:$0xff]
        %v1433 = vld [vmem:[#allocation2 + $0xe8] sm:$0xff]
        %v1434 = vld [vmem:[#allocation2 + $0xf0] sm:$0xff]
        %v1435 = vld [vmem:[#allocation2 + $0xf8] sm:$0xff]
        %v1436 = vld [vmem:[%s382] sm:$0xff]
        %v1437 = vld [vmem:[%s382 + $0x8] sm:$0xff]
        %v1438 = vld [vmem:[%s382 + $0x10] sm:$0xff]
        %v1439 = vld [vmem:[%s382 + $0x18] sm:$0xff]
        %v1440 = vld [vmem:[%s382 + $0x20] sm:$0xff]
        %v1441 = vld [vmem:[%s382 + $0x28] sm:$0xff]
        %v1442 = vld [vmem:[%s382 + $0x30] sm:$0xff]
        %v1443 = vld [vmem:[%s382 + $0x38] sm:$0xff]
        %v1444 = vld [vmem:[%s382 + $0x40] sm:$0xff]
        %v1445 = vld [vmem:[%s382 + $0x48] sm:$0xff]
        %v1446 = vld [vmem:[%s382 + $0x50] sm:$0xff]
        %v1447 = vld [vmem:[%s382 + $0x58] sm:$0xff]
        %v1448 = vld [vmem:[%s382 + $0x60] sm:$0xff]
        %v1449 = vld [vmem:[%s382 + $0x68] sm:$0xff]
        %v1450 = vld [vmem:[%s382 + $0x70] sm:$0xff]
        %v1451 = vld [vmem:[%s382 + $0x78] sm:$0xff]
        %v1452 = vld [vmem:[%s382 + $0x80] sm:$0xff]
        %v1453 = vld [vmem:[%s382 + $0x88] sm:$0xff]
        %v1454 = vld [vmem:[%s382 + $0x90] sm:$0xff]
        %v1455 = vld [vmem:[%s382 + $0x98] sm:$0xff]
        %v1456 = vld [vmem:[%s382 + $0xa0] sm:$0xff]
        %v1457 = vld [vmem:[%s382 + $0xa8] sm:$0xff]
        %v1458 = vld [vmem:[%s382 + $0xb0] sm:$0xff]
        %v1459 = vld [vmem:[%s382 + $0xb8] sm:$0xff]
        %v1460 = vld [vmem:[%s382 + $0xc0] sm:$0xff]
        %v1461 = vld [vmem:[%s382 + $0xc8] sm:$0xff]
        %v1462 = vld [vmem:[%s382 + $0xd0] sm:$0xff]
        %v1463 = vld [vmem:[%s382 + $0xd8] sm:$0xff]
        %v1464 = vld [vmem:[%s382 + $0xe0] sm:$0xff]
        %v1465 = vld [vmem:[%s382 + $0xe8] sm:$0xff]
        %v1466 = vld [vmem:[%s382 + $0xf0] sm:$0xff]
        %v1467 = vld [vmem:[%s382 + $0xf8] sm:$0xff]
        %v1468 = vld [vmem:[%s382 + $0x100] sm:$0xff]
        %v1469 = vld [vmem:[%s382 + $0x108] sm:$0xff]
        %v1470 = vld [vmem:[%s382 + $0x110] sm:$0xff]
        %v1471 = vld [vmem:[%s382 + $0x118] sm:$0xff]
        %v1472 = vld [vmem:[%s382 + $0x120] sm:$0xff]
        %v1473 = vld [vmem:[%s382 + $0x128] sm:$0xff]
        %v1474 = vld [vmem:[%s382 + $0x130] sm:$0xff]
        %v1475 = vld [vmem:[%s382 + $0x138] sm:$0xff]
        %v1476 = vld [vmem:[%s382 + $0x140] sm:$0xff]
        %v1477 = vld [vmem:[%s382 + $0x148] sm:$0xff]
        %v1478 = vld [vmem:[%s382 + $0x150] sm:$0xff]
        %v1479 = vld [vmem:[%s382 + $0x158] sm:$0xff]
        %v1480 = vld [vmem:[%s382 + $0x160] sm:$0xff]
        %v1481 = vld [vmem:[%s382 + $0x168] sm:$0xff]
        %v1482 = vld [vmem:[%s382 + $0x170] sm:$0xff]
        %v1483 = vld [vmem:[%s382 + $0x178] sm:$0xff]
        %v1484 = vld [vmem:[%s382 + $0x180] sm:$0xff]
        %v1485 = vld [vmem:[%s382 + $0x188] sm:$0xff]
        %v1486 = vld [vmem:[%s382 + $0x190] sm:$0xff]
        %v1487 = vld [vmem:[%s382 + $0x198] sm:$0xff]
        %v1488 = vld [vmem:[%s382 + $0x1a0] sm:$0xff]
        %v1489 = vld [vmem:[%s382 + $0x1a8] sm:$0xff]
        %v1490 = vld [vmem:[%s382 + $0x1b0] sm:$0xff]
        %v1491 = vld [vmem:[%s382 + $0x1b8] sm:$0xff]
        %v1492 = vld [vmem:[%s382 + $0x1c0] sm:$0xff]
        %v1493 = vld [vmem:[%s382 + $0x1c8] sm:$0xff]
        %v1494 = vld [vmem:[%s382 + $0x1d0] sm:$0xff]
        %v1495 = vld [vmem:[%s382 + $0x1d8] sm:$0xff]
        %v1496 = vld [vmem:[%s382 + $0x1e0] sm:$0xff]
        %v1497 = vld [vmem:[%s382 + $0x1e8] sm:$0xff]
        %v1498 = vld [vmem:[%s382 + $0x1f0] sm:$0xff]
        %v1499 = vld [vmem:[%s382 + $0x1f8] sm:$0xff]
        %v1564 = vunpack.c.l.b16 %v1436
        %v1565 = vunpack.c.h.b16 %v1436
        %v1566 = vunpack.c.l.b16 %v1437
        %v1567 = vunpack.c.h.b16 %v1437
        %v1568 = vunpack.c.l.b16 %v1438
        %v1569 = vunpack.c.h.b16 %v1438
        %v1570 = vunpack.c.l.b16 %v1439
        %v1571 = vunpack.c.h.b16 %v1439
        %v1572 = vunpack.c.l.b16 %v1440
        %v1573 = vunpack.c.h.b16 %v1440
        %v1574 = vunpack.c.l.b16 %v1441
        %v1575 = vunpack.c.h.b16 %v1441
        %v1576 = vunpack.c.l.b16 %v1442
        %v1577 = vunpack.c.h.b16 %v1442
        %v1578 = vunpack.c.l.b16 %v1443
        %v1579 = vunpack.c.h.b16 %v1443
        %v1580 = vunpack.c.l.b16 %v1444
        %v1581 = vunpack.c.h.b16 %v1444
        %v1582 = vunpack.c.l.b16 %v1445
        %v1583 = vunpack.c.h.b16 %v1445
        %v1584 = vunpack.c.l.b16 %v1446
        %v1585 = vunpack.c.h.b16 %v1446
        %v1586 = vunpack.c.l.b16 %v1447
        %v1587 = vunpack.c.h.b16 %v1447
        %v1588 = vunpack.c.l.b16 %v1448
        %v1589 = vunpack.c.h.b16 %v1448
        %v1590 = vunpack.c.l.b16 %v1449
        %v1591 = vunpack.c.h.b16 %v1449
        %v1592 = vunpack.c.l.b16 %v1450
        %v1593 = vunpack.c.h.b16 %v1450
        %v1594 = vunpack.c.l.b16 %v1451
        %v1595 = vunpack.c.h.b16 %v1451
        %v1596 = vunpack.c.l.b16 %v1452
        %v1597 = vunpack.c.h.b16 %v1452
        %v1598 = vunpack.c.l.b16 %v1453
        %v1599 = vunpack.c.h.b16 %v1453
        %v1600 = vunpack.c.l.b16 %v1454
        %v1601 = vunpack.c.h.b16 %v1454
        %v1602 = vunpack.c.l.b16 %v1455
        %v1603 = vunpack.c.h.b16 %v1455
        %v1604 = vunpack.c.l.b16 %v1456
        %v1605 = vunpack.c.h.b16 %v1456
        %v1606 = vunpack.c.l.b16 %v1457
        %v1607 = vunpack.c.h.b16 %v1457
        %v1608 = vunpack.c.l.b16 %v1458
        %v1609 = vunpack.c.h.b16 %v1458
        %v1610 = vunpack.c.l.b16 %v1459
        %v1611 = vunpack.c.h.b16 %v1459
        %v1612 = vunpack.c.l.b16 %v1460
        %v1613 = vunpack.c.h.b16 %v1460
        %v1614 = vunpack.c.l.b16 %v1461
        %v1615 = vunpack.c.h.b16 %v1461
        %v1616 = vunpack.c.l.b16 %v1462
        %v1617 = vunpack.c.h.b16 %v1462
        %v1618 = vunpack.c.l.b16 %v1463
        %v1619 = vunpack.c.h.b16 %v1463
        %v1620 = vunpack.c.l.b16 %v1464
        %v1621 = vunpack.c.h.b16 %v1464
        %v1622 = vunpack.c.l.b16 %v1465
        %v1623 = vunpack.c.h.b16 %v1465
        %v1624 = vunpack.c.l.b16 %v1466
        %v1625 = vunpack.c.h.b16 %v1466
        %v1626 = vunpack.c.l.b16 %v1467
        %v1627 = vunpack.c.h.b16 %v1467
        %v1628 = vunpack.c.l.b16 %v1468
        %v1629 = vunpack.c.h.b16 %v1468
        %v1630 = vunpack.c.l.b16 %v1469
        %v1631 = vunpack.c.h.b16 %v1469
        %v1632 = vunpack.c.l.b16 %v1470
        %v1633 = vunpack.c.h.b16 %v1470
        %v1634 = vunpack.c.l.b16 %v1471
        %v1635 = vunpack.c.h.b16 %v1471
        %v1636 = vunpack.c.l.b16 %v1472
        %v1637 = vunpack.c.h.b16 %v1472
        %v1638 = vunpack.c.l.b16 %v1473
        %v1639 = vunpack.c.h.b16 %v1473
        %v1640 = vunpack.c.l.b16 %v1474
        %v1641 = vunpack.c.h.b16 %v1474
        %v1642 = vunpack.c.l.b16 %v1475
        %v1643 = vunpack.c.h.b16 %v1475
        %v1644 = vunpack.c.l.b16 %v1476
        %v1645 = vunpack.c.h.b16 %v1476
        %v1646 = vunpack.c.l.b16 %v1477
        %v1647 = vunpack.c.h.b16 %v1477
        %v1648 = vunpack.c.l.b16 %v1478
        %v1649 = vunpack.c.h.b16 %v1478
        %v1650 = vunpack.c.l.b16 %v1479
        %v1651 = vunpack.c.h.b16 %v1479
        %v1652 = vunpack.c.l.b16 %v1480
        %v1653 = vunpack.c.h.b16 %v1480
        %v1654 = vunpack.c.l.b16 %v1481
        %v1655 = vunpack.c.h.b16 %v1481
        %v1656 = vunpack.c.l.b16 %v1482
        %v1657 = vunpack.c.h.b16 %v1482
        %v1658 = vunpack.c.l.b16 %v1483
        %v1659 = vunpack.c.h.b16 %v1483
        %v1660 = vunpack.c.l.b16 %v1484
        %v1661 = vunpack.c.h.b16 %v1484
        %v1662 = vunpack.c.l.b16 %v1485
        %v1663 = vunpack.c.h.b16 %v1485
        %v1664 = vunpack.c.l.b16 %v1486
        %v1665 = vunpack.c.h.b16 %v1486
        %v1666 = vunpack.c.l.b16 %v1487
        %v1667 = vunpack.c.h.b16 %v1487
        %v1668 = vunpack.c.l.b16 %v1488
        %v1669 = vunpack.c.h.b16 %v1488
        %v1670 = vunpack.c.l.b16 %v1489
        %v1671 = vunpack.c.h.b16 %v1489
        %v1672 = vunpack.c.l.b16 %v1490
        %v1673 = vunpack.c.h.b16 %v1490
        %v1674 = vunpack.c.l.b16 %v1491
        %v1675 = vunpack.c.h.b16 %v1491
        %v1676 = vunpack.c.l.b16 %v1492
        %v1677 = vunpack.c.h.b16 %v1492
        %v1678 = vunpack.c.l.b16 %v1493
        %v1679 = vunpack.c.h.b16 %v1493
        %v1680 = vunpack.c.l.b16 %v1494
        %v1681 = vunpack.c.h.b16 %v1494
        %v1682 = vunpack.c.l.b16 %v1495
        %v1683 = vunpack.c.h.b16 %v1495
        %v1684 = vunpack.c.l.b16 %v1496
        %v1685 = vunpack.c.h.b16 %v1496
        %v1686 = vunpack.c.l.b16 %v1497
        %v1687 = vunpack.c.h.b16 %v1497
        %v1688 = vunpack.c.l.b16 %v1498
        %v1689 = vunpack.c.h.b16 %v1498
        %v1690 = vunpack.c.l.b16 %v1499
        %v1691 = vunpack.c.h.b16 %v1499
        %v1692 = vpack.c.b16 %v1568, %v1564
        %v1693 = vpack.c.b16 %v1569, %v1565
        %v1694 = vpack.c.b16 %v1570, %v1566
        %v1695 = vpack.c.b16 %v1571, %v1567
        %v1696 = vpack.c.b16 %v1576, %v1572
        %v1697 = vpack.c.b16 %v1577, %v1573
        %v1698 = vpack.c.b16 %v1578, %v1574
        %v1699 = vpack.c.b16 %v1579, %v1575
        %v1700 = vpack.c.b16 %v1584, %v1580
        %v1701 = vpack.c.b16 %v1585, %v1581
        %v1702 = vpack.c.b16 %v1586, %v1582
        %v1703 = vpack.c.b16 %v1587, %v1583
        %v1704 = vpack.c.b16 %v1592, %v1588
        %v1705 = vpack.c.b16 %v1593, %v1589
        %v1706 = vpack.c.b16 %v1594, %v1590
        %v1707 = vpack.c.b16 %v1595, %v1591
        %v1708 = vpack.c.b16 %v1600, %v1596
        %v1709 = vpack.c.b16 %v1601, %v1597
        %v1710 = vpack.c.b16 %v1602, %v1598
        %v1711 = vpack.c.b16 %v1603, %v1599
        %v1712 = vpack.c.b16 %v1608, %v1604
        %v1713 = vpack.c.b16 %v1609, %v1605
        %v1714 = vpack.c.b16 %v1610, %v1606
        %v1715 = vpack.c.b16 %v1611, %v1607
        %v1716 = vpack.c.b16 %v1616, %v1612
        %v1717 = vpack.c.b16 %v1617, %v1613
        %v1718 = vpack.c.b16 %v1618, %v1614
        %v1719 = vpack.c.b16 %v1619, %v1615
        %v1720 = vpack.c.b16 %v1624, %v1620
        %v1721 = vpack.c.b16 %v1625, %v1621
        %v1722 = vpack.c.b16 %v1626, %v1622
        %v1723 = vpack.c.b16 %v1627, %v1623
        %v1724 = vpack.c.b16 %v1632, %v1628
        %v1725 = vpack.c.b16 %v1633, %v1629
        %v1726 = vpack.c.b16 %v1634, %v1630
        %v1727 = vpack.c.b16 %v1635, %v1631
        %v1728 = vpack.c.b16 %v1640, %v1636
        %v1729 = vpack.c.b16 %v1641, %v1637
        %v1730 = vpack.c.b16 %v1642, %v1638
        %v1731 = vpack.c.b16 %v1643, %v1639
        %v1732 = vpack.c.b16 %v1648, %v1644
        %v1733 = vpack.c.b16 %v1649, %v1645
        %v1734 = vpack.c.b16 %v1650, %v1646
        %v1735 = vpack.c.b16 %v1651, %v1647
        %v1736 = vpack.c.b16 %v1656, %v1652
        %v1737 = vpack.c.b16 %v1657, %v1653
        %v1738 = vpack.c.b16 %v1658, %v1654
        %v1739 = vpack.c.b16 %v1659, %v1655
        %v1740 = vpack.c.b16 %v1664, %v1660
        %v1741 = vpack.c.b16 %v1665, %v1661
        %v1742 = vpack.c.b16 %v1666, %v1662
        %v1743 = vpack.c.b16 %v1667, %v1663
        %v1744 = vpack.c.b16 %v1672, %v1668
        %v1745 = vpack.c.b16 %v1673, %v1669
        %v1746 = vpack.c.b16 %v1674, %v1670
        %v1747 = vpack.c.b16 %v1675, %v1671
        %v1748 = vpack.c.b16 %v1680, %v1676
        %v1749 = vpack.c.b16 %v1681, %v1677
        %v1750 = vpack.c.b16 %v1682, %v1678
        %v1751 = vpack.c.b16 %v1683, %v1679
        %v1752 = vpack.c.b16 %v1688, %v1684
        %v1753 = vpack.c.b16 %v1689, %v1685
        %v1754 = vpack.c.b16 %v1690, %v1686
        %v1755 = vpack.c.b16 %v1691, %v1687
        %1820 = vmatpush.bf16.msra.mxu0 %v1379
        %1821 = vmatpush.bf16.msra.mxu0 %v1378
        %1822 = vmatpush.bf16.msra.mxu0 %v1377
        %1823 = vmatpush.bf16.msra.mxu0 %v1376
        %1824 = vmatpush.bf16.msra.mxu0 %v1375
        %1825 = vmatpush.bf16.msra.mxu0 %v1374
        %1826 = vmatpush.bf16.msra.mxu0 %v1373
        %1827 = vmatpush.bf16.msra.mxu0 %v1372
        %1828 = vmatmul.bf16.gmra.mxu0 %v1692
        %v1829 = vpop.f32.mrf.mxu0
        %v1830 = vadd.f32 0.0, %v1829
        %v1831 = vpop.f32.mrf.mxu0
        %v1832 = vadd.f32 0.0, %v1831
        %1833 = vmatmul.bf16.gmra.mxu0 %v1696
        %v1834 = vpop.f32.mrf.mxu0
        %v1835 = vadd.f32 0.0, %v1834
        %v1836 = vpop.f32.mrf.mxu0
        %v1837 = vadd.f32 0.0, %v1836
        %1838 = vmatmul.bf16.gmra.mxu0 %v1700
        %v1839 = vpop.f32.mrf.mxu0
        %v1840 = vadd.f32 0.0, %v1839
        %v1841 = vpop.f32.mrf.mxu0
        %v1842 = vadd.f32 0.0, %v1841
        %1843 = vmatmul.bf16.gmra.mxu0 %v1704
        %v1844 = vpop.f32.mrf.mxu0
        %v1845 = vadd.f32 0.0, %v1844
        %v1846 = vpop.f32.mrf.mxu0
        %v1847 = vadd.f32 0.0, %v1846
        %1848 = vmatmul.bf16.gmra.mxu0 %v1708
        %v1849 = vpop.f32.mrf.mxu0
        %v1850 = vadd.f32 0.0, %v1849
        %v1851 = vpop.f32.mrf.mxu0
        %v1852 = vadd.f32 0.0, %v1851
        %1853 = vmatmul.bf16.gmra.mxu0 %v1712
        %v1854 = vpop.f32.mrf.mxu0
        %v1855 = vadd.f32 0.0, %v1854
        %v1856 = vpop.f32.mrf.mxu0
        %v1857 = vadd.f32 0.0, %v1856
        %1858 = vmatmul.bf16.gmra.mxu0 %v1716
        %v1859 = vpop.f32.mrf.mxu0
        %v1860 = vadd.f32 0.0, %v1859
        %v1861 = vpop.f32.mrf.mxu0
        %v1862 = vadd.f32 0.0, %v1861
        %1863 = vmatmul.bf16.gmra.mxu0 %v1720
        %v1864 = vpop.f32.mrf.mxu0
        %v1865 = vadd.f32 0.0, %v1864
        %v1866 = vpop.f32.mrf.mxu0
        %v1867 = vadd.f32 0.0, %v1866
        %1868 = vmatmul.bf16.gmra.mxu0 %v1724
        %v1869 = vpop.f32.mrf.mxu0
        %v1870 = vadd.f32 0.0, %v1869
        %v1871 = vpop.f32.mrf.mxu0
        %v1872 = vadd.f32 0.0, %v1871
        %1873 = vmatmul.bf16.gmra.mxu0 %v1728
        %v1874 = vpop.f32.mrf.mxu0
        %v1875 = vadd.f32 0.0, %v1874
        %v1876 = vpop.f32.mrf.mxu0
        %v1877 = vadd.f32 0.0, %v1876
        %1878 = vmatmul.bf16.gmra.mxu0 %v1732
        %v1879 = vpop.f32.mrf.mxu0
        %v1880 = vadd.f32 0.0, %v1879
        %v1881 = vpop.f32.mrf.mxu0
        %v1882 = vadd.f32 0.0, %v1881
        %1883 = vmatmul.bf16.gmra.mxu0 %v1736
        %v1884 = vpop.f32.mrf.mxu0
        %v1885 = vadd.f32 0.0, %v1884
        %v1886 = vpop.f32.mrf.mxu0
        %v1887 = vadd.f32 0.0, %v1886
        %1888 = vmatmul.bf16.gmra.mxu0 %v1740
        %v1889 = vpop.f32.mrf.mxu0
        %v1890 = vadd.f32 0.0, %v1889
        %v1891 = vpop.f32.mrf.mxu0
        %v1892 = vadd.f32 0.0, %v1891
        %1893 = vmatmul.bf16.gmra.mxu0 %v1744
        %v1894 = vpop.f32.mrf.mxu0
        %v1895 = vadd.f32 0.0, %v1894
        %v1896 = vpop.f32.mrf.mxu0
        %v1897 = vadd.f32 0.0, %v1896
        %1898 = vmatmul.bf16.gmra.mxu0 %v1748
        %v1899 = vpop.f32.mrf.mxu0
        %v1900 = vadd.f32 0.0, %v1899
        %v1901 = vpop.f32.mrf.mxu0
        %v1902 = vadd.f32 0.0, %v1901
        %1903 = vmatmul.bf16.gmra.mxu0 %v1752
        %v1904 = vpop.f32.mrf.mxu0
        %v1905 = vadd.f32 0.0, %v1904
        %v1906 = vpop.f32.mrf.mxu0
        %v1907 = vadd.f32 0.0, %v1906
        %1908 = vdwg.mxu0
        %1909 = vmatpush.bf16.msra.mxu0 %v1387
        %1910 = vmatpush.bf16.msra.mxu0 %v1386
        %1911 = vmatpush.bf16.msra.mxu0 %v1385
        %1912 = vmatpush.bf16.msra.mxu0 %v1384
        %1913 = vmatpush.bf16.msra.mxu0 %v1383
        %1914 = vmatpush.bf16.msra.mxu0 %v1382
        %1915 = vmatpush.bf16.msra.mxu0 %v1381
        %1916 = vmatpush.bf16.msra.mxu0 %v1380
        %1917 = vmatmul.bf16.gmra.mxu0 %v1693
        %v1918 = vpop.f32.mrf.mxu0
        %v1919 = vadd.f32 %v1830, %v1918
        %v1920 = vpop.f32.mrf.mxu0
        %v1921 = vadd.f32 %v1832, %v1920
        %1922 = vmatmul.bf16.gmra.mxu0 %v1697
        %v1923 = vpop.f32.mrf.mxu0
        %v1924 = vadd.f32 %v1835, %v1923
        %v1925 = vpop.f32.mrf.mxu0
        %v1926 = vadd.f32 %v1837, %v1925
        %1927 = vmatmul.bf16.gmra.mxu0 %v1701
        %v1928 = vpop.f32.mrf.mxu0
        %v1929 = vadd.f32 %v1840, %v1928
        %v1930 = vpop.f32.mrf.mxu0
        %v1931 = vadd.f32 %v1842, %v1930
        %1932 = vmatmul.bf16.gmra.mxu0 %v1705
        %v1933 = vpop.f32.mrf.mxu0
        %v1934 = vadd.f32 %v1845, %v1933
        %v1935 = vpop.f32.mrf.mxu0
        %v1936 = vadd.f32 %v1847, %v1935
        %1937 = vmatmul.bf16.gmra.mxu0 %v1709
        %v1938 = vpop.f32.mrf.mxu0
        %v1939 = vadd.f32 %v1850, %v1938
        %v1940 = vpop.f32.mrf.mxu0
        %v1941 = vadd.f32 %v1852, %v1940
        %1942 = vmatmul.bf16.gmra.mxu0 %v1713
        %v1943 = vpop.f32.mrf.mxu0
        %v1944 = vadd.f32 %v1855, %v1943
        %v1945 = vpop.f32.mrf.mxu0
        %v1946 = vadd.f32 %v1857, %v1945
        %1947 = vmatmul.bf16.gmra.mxu0 %v1717
        %v1948 = vpop.f32.mrf.mxu0
        %v1949 = vadd.f32 %v1860, %v1948
        %v1950 = vpop.f32.mrf.mxu0
        %v1951 = vadd.f32 %v1862, %v1950
        %1952 = vmatmul.bf16.gmra.mxu0 %v1721
        %v1953 = vpop.f32.mrf.mxu0
        %v1954 = vadd.f32 %v1865, %v1953
        %v1955 = vpop.f32.mrf.mxu0
        %v1956 = vadd.f32 %v1867, %v1955
        %1957 = vmatmul.bf16.gmra.mxu0 %v1725
        %v1958 = vpop.f32.mrf.mxu0
        %v1959 = vadd.f32 %v1870, %v1958
        %v1960 = vpop.f32.mrf.mxu0
        %v1961 = vadd.f32 %v1872, %v1960
        %1962 = vmatmul.bf16.gmra.mxu0 %v1729
        %v1963 = vpop.f32.mrf.mxu0
        %v1964 = vadd.f32 %v1875, %v1963
        %v1965 = vpop.f32.mrf.mxu0
        %v1966 = vadd.f32 %v1877, %v1965
        %1967 = vmatmul.bf16.gmra.mxu0 %v1733
        %v1968 = vpop.f32.mrf.mxu0
        %v1969 = vadd.f32 %v1880, %v1968
        %v1970 = vpop.f32.mrf.mxu0
        %v1971 = vadd.f32 %v1882, %v1970
        %1972 = vmatmul.bf16.gmra.mxu0 %v1737
        %v1973 = vpop.f32.mrf.mxu0
        %v1974 = vadd.f32 %v1885, %v1973
        %v1975 = vpop.f32.mrf.mxu0
        %v1976 = vadd.f32 %v1887, %v1975
        %1977 = vmatmul.bf16.gmra.mxu0 %v1741
        %v1978 = vpop.f32.mrf.mxu0
        %v1979 = vadd.f32 %v1890, %v1978
        %v1980 = vpop.f32.mrf.mxu0
        %v1981 = vadd.f32 %v1892, %v1980
        %1982 = vmatmul.bf16.gmra.mxu0 %v1745
        %v1983 = vpop.f32.mrf.mxu0
        %v1984 = vadd.f32 %v1895, %v1983
        %v1985 = vpop.f32.mrf.mxu0
        %v1986 = vadd.f32 %v1897, %v1985
        %1987 = vmatmul.bf16.gmra.mxu0 %v1749
        %v1988 = vpop.f32.mrf.mxu0
        %v1989 = vadd.f32 %v1900, %v1988
        %v1990 = vpop.f32.mrf.mxu0
        %v1991 = vadd.f32 %v1902, %v1990
        %1992 = vmatmul.bf16.gmra.mxu0 %v1753
        %v1993 = vpop.f32.mrf.mxu0
        %v1994 = vadd.f32 %v1905, %v1993
        %v1995 = vpop.f32.mrf.mxu0
        %v1996 = vadd.f32 %v1907, %v1995
        %1997 = vdwg.mxu0
        %1998 = vmatpush.bf16.msra.mxu0 %v1395
        %1999 = vmatpush.bf16.msra.mxu0 %v1394
        %2000 = vmatpush.bf16.msra.mxu0 %v1393
        %2001 = vmatpush.bf16.msra.mxu0 %v1392
        %2002 = vmatpush.bf16.msra.mxu0 %v1391
        %2003 = vmatpush.bf16.msra.mxu0 %v1390
        %2004 = vmatpush.bf16.msra.mxu0 %v1389
        %2005 = vmatpush.bf16.msra.mxu0 %v1388
        %2006 = vmatmul.bf16.gmra.mxu0 %v1694
        %v2007 = vpop.f32.mrf.mxu0
        %v2008 = vadd.f32 %v1919, %v2007
        %v2009 = vpop.f32.mrf.mxu0
        %v2010 = vadd.f32 %v1921, %v2009
        %2011 = vmatmul.bf16.gmra.mxu0 %v1698
        %v2012 = vpop.f32.mrf.mxu0
        %v2013 = vadd.f32 %v1924, %v2012
        %v2014 = vpop.f32.mrf.mxu0
        %v2015 = vadd.f32 %v1926, %v2014
        %2016 = vmatmul.bf16.gmra.mxu0 %v1702
        %v2017 = vpop.f32.mrf.mxu0
        %v2018 = vadd.f32 %v1929, %v2017
        %v2019 = vpop.f32.mrf.mxu0
        %v2020 = vadd.f32 %v1931, %v2019
        %2021 = vmatmul.bf16.gmra.mxu0 %v1706
        %v2022 = vpop.f32.mrf.mxu0
        %v2023 = vadd.f32 %v1934, %v2022
        %v2024 = vpop.f32.mrf.mxu0
        %v2025 = vadd.f32 %v1936, %v2024
        %2026 = vmatmul.bf16.gmra.mxu0 %v1710
        %v2027 = vpop.f32.mrf.mxu0
        %v2028 = vadd.f32 %v1939, %v2027
        %v2029 = vpop.f32.mrf.mxu0
        %v2030 = vadd.f32 %v1941, %v2029
        %2031 = vmatmul.bf16.gmra.mxu0 %v1714
        %v2032 = vpop.f32.mrf.mxu0
        %v2033 = vadd.f32 %v1944, %v2032
        %v2034 = vpop.f32.mrf.mxu0
        %v2035 = vadd.f32 %v1946, %v2034
        %2036 = vmatmul.bf16.gmra.mxu0 %v1718
        %v2037 = vpop.f32.mrf.mxu0
        %v2038 = vadd.f32 %v1949, %v2037
        %v2039 = vpop.f32.mrf.mxu0
        %v2040 = vadd.f32 %v1951, %v2039
        %2041 = vmatmul.bf16.gmra.mxu0 %v1722
        %v2042 = vpop.f32.mrf.mxu0
        %v2043 = vadd.f32 %v1954, %v2042
        %v2044 = vpop.f32.mrf.mxu0
        %v2045 = vadd.f32 %v1956, %v2044
        %2046 = vmatmul.bf16.gmra.mxu0 %v1726
        %v2047 = vpop.f32.mrf.mxu0
        %v2048 = vadd.f32 %v1959, %v2047
        %v2049 = vpop.f32.mrf.mxu0
        %v2050 = vadd.f32 %v1961, %v2049
        %2051 = vmatmul.bf16.gmra.mxu0 %v1730
        %v2052 = vpop.f32.mrf.mxu0
        %v2053 = vadd.f32 %v1964, %v2052
        %v2054 = vpop.f32.mrf.mxu0
        %v2055 = vadd.f32 %v1966, %v2054
        %2056 = vmatmul.bf16.gmra.mxu0 %v1734
        %v2057 = vpop.f32.mrf.mxu0
        %v2058 = vadd.f32 %v1969, %v2057
        %v2059 = vpop.f32.mrf.mxu0
        %v2060 = vadd.f32 %v1971, %v2059
        %2061 = vmatmul.bf16.gmra.mxu0 %v1738
        %v2062 = vpop.f32.mrf.mxu0
        %v2063 = vadd.f32 %v1974, %v2062
        %v2064 = vpop.f32.mrf.mxu0
        %v2065 = vadd.f32 %v1976, %v2064
        %2066 = vmatmul.bf16.gmra.mxu0 %v1742
        %v2067 = vpop.f32.mrf.mxu0
        %v2068 = vadd.f32 %v1979, %v2067
        %v2069 = vpop.f32.mrf.mxu0
        %v2070 = vadd.f32 %v1981, %v2069
        %2071 = vmatmul.bf16.gmra.mxu0 %v1746
        %v2072 = vpop.f32.mrf.mxu0
        %v2073 = vadd.f32 %v1984, %v2072
        %v2074 = vpop.f32.mrf.mxu0
        %v2075 = vadd.f32 %v1986, %v2074
        %2076 = vmatmul.bf16.gmra.mxu0 %v1750
        %v2077 = vpop.f32.mrf.mxu0
        %v2078 = vadd.f32 %v1989, %v2077
        %v2079 = vpop.f32.mrf.mxu0
        %v2080 = vadd.f32 %v1991, %v2079
        %2081 = vmatmul.bf16.gmra.mxu0 %v1754
        %v2082 = vpop.f32.mrf.mxu0
        %v2083 = vadd.f32 %v1994, %v2082
        %v2084 = vpop.f32.mrf.mxu0
        %v2085 = vadd.f32 %v1996, %v2084
        %2086 = vdwg.mxu0
        %2087 = vmatpush.bf16.msra.mxu0 %v1403
        %2088 = vmatpush.bf16.msra.mxu0 %v1402
        %2089 = vmatpush.bf16.msra.mxu0 %v1401
        %2090 = vmatpush.bf16.msra.mxu0 %v1400
        %2091 = vmatpush.bf16.msra.mxu0 %v1399
        %2092 = vmatpush.bf16.msra.mxu0 %v1398
        %2093 = vmatpush.bf16.msra.mxu0 %v1397
        %2094 = vmatpush.bf16.msra.mxu0 %v1396
        %2095 = vmatmul.bf16.gmra.mxu0 %v1695
        %v2096 = vpop.f32.mrf.mxu0
        %v2097 = vadd.f32 %v2008, %v2096
        %v2098 = vpop.f32.mrf.mxu0
        %v2099 = vadd.f32 %v2010, %v2098
        %2100 = vmatmul.bf16.gmra.mxu0 %v1699
        %v2101 = vpop.f32.mrf.mxu0
        %v2102 = vadd.f32 %v2013, %v2101
        %v2103 = vpop.f32.mrf.mxu0
        %v2104 = vadd.f32 %v2015, %v2103
        %2105 = vmatmul.bf16.gmra.mxu0 %v1703
        %v2106 = vpop.f32.mrf.mxu0
        %v2107 = vadd.f32 %v2018, %v2106
        %v2108 = vpop.f32.mrf.mxu0
        %v2109 = vadd.f32 %v2020, %v2108
        %2110 = vmatmul.bf16.gmra.mxu0 %v1707
        %v2111 = vpop.f32.mrf.mxu0
        %v2112 = vadd.f32 %v2023, %v2111
        %v2113 = vpop.f32.mrf.mxu0
        %v2114 = vadd.f32 %v2025, %v2113
        %2115 = vmatmul.bf16.gmra.mxu0 %v1711
        %v2116 = vpop.f32.mrf.mxu0
        %v2117 = vadd.f32 %v2028, %v2116
        %v2118 = vpop.f32.mrf.mxu0
        %v2119 = vadd.f32 %v2030, %v2118
        %2120 = vmatmul.bf16.gmra.mxu0 %v1715
        %v2121 = vpop.f32.mrf.mxu0
        %v2122 = vadd.f32 %v2033, %v2121
        %v2123 = vpop.f32.mrf.mxu0
        %v2124 = vadd.f32 %v2035, %v2123
        %2125 = vmatmul.bf16.gmra.mxu0 %v1719
        %v2126 = vpop.f32.mrf.mxu0
        %v2127 = vadd.f32 %v2038, %v2126
        %v2128 = vpop.f32.mrf.mxu0
        %v2129 = vadd.f32 %v2040, %v2128
        %2130 = vmatmul.bf16.gmra.mxu0 %v1723
        %v2131 = vpop.f32.mrf.mxu0
        %v2132 = vadd.f32 %v2043, %v2131
        %v2133 = vpop.f32.mrf.mxu0
        %v2134 = vadd.f32 %v2045, %v2133
        %2135 = vmatmul.bf16.gmra.mxu0 %v1727
        %v2136 = vpop.f32.mrf.mxu0
        %v2137 = vadd.f32 %v2048, %v2136
        %v2138 = vpop.f32.mrf.mxu0
        %v2139 = vadd.f32 %v2050, %v2138
        %2140 = vmatmul.bf16.gmra.mxu0 %v1731
        %v2141 = vpop.f32.mrf.mxu0
        %v2142 = vadd.f32 %v2053, %v2141
        %v2143 = vpop.f32.mrf.mxu0
        %v2144 = vadd.f32 %v2055, %v2143
        %2145 = vmatmul.bf16.gmra.mxu0 %v1735
        %v2146 = vpop.f32.mrf.mxu0
        %v2147 = vadd.f32 %v2058, %v2146
        %v2148 = vpop.f32.mrf.mxu0
        %v2149 = vadd.f32 %v2060, %v2148
        %2150 = vmatmul.bf16.gmra.mxu0 %v1739
        %v2151 = vpop.f32.mrf.mxu0
        %v2152 = vadd.f32 %v2063, %v2151
        %v2153 = vpop.f32.mrf.mxu0
        %v2154 = vadd.f32 %v2065, %v2153
        %2155 = vmatmul.bf16.gmra.mxu0 %v1743
        %v2156 = vpop.f32.mrf.mxu0
        %v2157 = vadd.f32 %v2068, %v2156
        %v2158 = vpop.f32.mrf.mxu0
        %v2159 = vadd.f32 %v2070, %v2158
        %2160 = vmatmul.bf16.gmra.mxu0 %v1747
        %v2161 = vpop.f32.mrf.mxu0
        %v2162 = vadd.f32 %v2073, %v2161
        %v2163 = vpop.f32.mrf.mxu0
        %v2164 = vadd.f32 %v2075, %v2163
        %2165 = vmatmul.bf16.gmra.mxu0 %v1751
        %v2166 = vpop.f32.mrf.mxu0
        %v2167 = vadd.f32 %v2078, %v2166
        %v2168 = vpop.f32.mrf.mxu0
        %v2169 = vadd.f32 %v2080, %v2168
        %2170 = vmatmul.bf16.gmra.mxu0 %v1755
        %v2171 = vpop.f32.mrf.mxu0
        %v2172 = vadd.f32 %v2083, %v2171
        %v2173 = vpop.f32.mrf.mxu0
        %v2174 = vadd.f32 %v2085, %v2173
        %2175 = vdwg.mxu0
        %v2176 = vadd.f32 %v1404, %v2097
        %v2177 = vadd.f32 %v1405, %v2099
        %v2178 = vadd.f32 %v1406, %v2102
        %v2179 = vadd.f32 %v1407, %v2104
        %v2180 = vadd.f32 %v1408, %v2107
        %v2181 = vadd.f32 %v1409, %v2109
        %v2182 = vadd.f32 %v1410, %v2112
        %v2183 = vadd.f32 %v1411, %v2114
        %v2184 = vadd.f32 %v1412, %v2117
        %v2185 = vadd.f32 %v1413, %v2119
        %v2186 = vadd.f32 %v1414, %v2122
        %v2187 = vadd.f32 %v1415, %v2124
        %v2188 = vadd.f32 %v1416, %v2127
        %v2189 = vadd.f32 %v1417, %v2129
        %v2190 = vadd.f32 %v1418, %v2132
        %v2191 = vadd.f32 %v1419, %v2134
        %v2192 = vadd.f32 %v1420, %v2137
        %v2193 = vadd.f32 %v1421, %v2139
        %v2194 = vadd.f32 %v1422, %v2142
        %v2195 = vadd.f32 %v1423, %v2144
        %v2196 = vadd.f32 %v1424, %v2147
        %v2197 = vadd.f32 %v1425, %v2149
        %v2198 = vadd.f32 %v1426, %v2152
        %v2199 = vadd.f32 %v1427, %v2154
        %v2200 = vadd.f32 %v1428, %v2157
        %v2201 = vadd.f32 %v1429, %v2159
        %v2202 = vadd.f32 %v1430, %v2162
        %v2203 = vadd.f32 %v1431, %v2164
        %v2204 = vadd.f32 %v1432, %v2167
        %v2205 = vadd.f32 %v1433, %v2169
        %v2206 = vadd.f32 %v1434, %v2172
        %v2207 = vadd.f32 %v1435, %v2174
        %2208 = vst [vmem:[#allocation2] sm:$0xff] %v2176
        %2209 = vst [vmem:[#allocation2 + $0x8] sm:$0xff] %v2177
        %2210 = vst [vmem:[#allocation2 + $0x10] sm:$0xff] %v2178
        %2211 = vst [vmem:[#allocation2 + $0x18] sm:$0xff] %v2179
        %2212 = vst [vmem:[#allocation2 + $0x20] sm:$0xff] %v2180
        %2213 = vst [vmem:[#allocation2 + $0x28] sm:$0xff] %v2181
        %2214 = vst [vmem:[#allocation2 + $0x30] sm:$0xff] %v2182
        %2215 = vst [vmem:[#allocation2 + $0x38] sm:$0xff] %v2183
        %2216 = vst [vmem:[#allocation2 + $0x40] sm:$0xff] %v2184
        %2217 = vst [vmem:[#allocation2 + $0x48] sm:$0xff] %v2185
        %2218 = vst [vmem:[#allocation2 + $0x50] sm:$0xff] %v2186
        %2219 = vst [vmem:[#allocation2 + $0x58] sm:$0xff] %v2187
        %2220 = vst [vmem:[#allocation2 + $0x60] sm:$0xff] %v2188
        %2221 = vst [vmem:[#allocation2 + $0x68] sm:$0xff] %v2189
        %2222 = vst [vmem:[#allocation2 + $0x70] sm:$0xff] %v2190
        %2223 = vst [vmem:[#allocation2 + $0x78] sm:$0xff] %v2191
        %2224 = vst [vmem:[#allocation2 + $0x80] sm:$0xff] %v2192
        %2225 = vst [vmem:[#allocation2 + $0x88] sm:$0xff] %v2193
        %2226 = vst [vmem:[#allocation2 + $0x90] sm:$0xff] %v2194
        %2227 = vst [vmem:[#allocation2 + $0x98] sm:$0xff] %v2195
        %2228 = vst [vmem:[#allocation2 + $0xa0] sm:$0xff] %v2196
        %2229 = vst [vmem:[#allocation2 + $0xa8] sm:$0xff] %v2197
        %2230 = vst [vmem:[#allocation2 + $0xb0] sm:$0xff] %v2198
        %2231 = vst [vmem:[#allocation2 + $0xb8] sm:$0xff] %v2199
        %2232 = vst [vmem:[#allocation2 + $0xc0] sm:$0xff] %v2200
        %2233 = vst [vmem:[#allocation2 + $0xc8] sm:$0xff] %v2201
        %2234 = vst [vmem:[#allocation2 + $0xd0] sm:$0xff] %v2202
        %2235 = vst [vmem:[#allocation2 + $0xd8] sm:$0xff] %v2203
        %2236 = vst [vmem:[#allocation2 + $0xe0] sm:$0xff] %v2204
        %2237 = vst [vmem:[#allocation2 + $0xe8] sm:$0xff] %v2205
        %2238 = vst [vmem:[#allocation2 + $0xf0] sm:$0xff] %v2206
        %2239 = vst [vmem:[#allocation2 + $0xf8] sm:$0xff] %v2207
        // Predicated region
        $region61: #{tpu_custom_call.1} parent=47 // pred_check
          %p2240 = pneg %p399
        $region62: #{tpu_custom_call.1} parent=47 // pred_check_branch
          %2242 = sbr.rel (%p2240) target = $region64
        $region63: #{tpu_custom_call.1} parent=47 // pred_region
          %v2243 = vld [vmem:[#allocation2] sm:$0xff]
          %v2244 = vld [vmem:[#allocation2 + $0x8] sm:$0xff]
          %v2245 = vld [vmem:[#allocation2 + $0x10] sm:$0xff]
          %v2246 = vld [vmem:[#allocation2 + $0x18] sm:$0xff]
          %v2247 = vld [vmem:[#allocation2 + $0x20] sm:$0xff]
          %v2248 = vld [vmem:[#allocation2 + $0x28] sm:$0xff]
          %v2249 = vld [vmem:[#allocation2 + $0x30] sm:$0xff]
          %v2250 = vld [vmem:[#allocation2 + $0x38] sm:$0xff]
          %v2251 = vld [vmem:[#allocation2 + $0x40] sm:$0xff]
          %v2252 = vld [vmem:[#allocation2 + $0x48] sm:$0xff]
          %v2253 = vld [vmem:[#allocation2 + $0x50] sm:$0xff]
          %v2254 = vld [vmem:[#allocation2 + $0x58] sm:$0xff]
          %v2255 = vld [vmem:[#allocation2 + $0x60] sm:$0xff]
          %v2256 = vld [vmem:[#allocation2 + $0x68] sm:$0xff]
          %v2257 = vld [vmem:[#allocation2 + $0x70] sm:$0xff]
          %v2258 = vld [vmem:[#allocation2 + $0x78] sm:$0xff]
          %v2259 = vld [vmem:[#allocation2 + $0x80] sm:$0xff]
          %v2260 = vld [vmem:[#allocation2 + $0x88] sm:$0xff]
          %v2261 = vld [vmem:[#allocation2 + $0x90] sm:$0xff]
          %v2262 = vld [vmem:[#allocation2 + $0x98] sm:$0xff]
          %v2263 = vld [vmem:[#allocation2 + $0xa0] sm:$0xff]
          %v2264 = vld [vmem:[#allocation2 + $0xa8] sm:$0xff]
          %v2265 = vld [vmem:[#allocation2 + $0xb0] sm:$0xff]
          %v2266 = vld [vmem:[#allocation2 + $0xb8] sm:$0xff]
          %v2267 = vld [vmem:[#allocation2 + $0xc0] sm:$0xff]
          %v2268 = vld [vmem:[#allocation2 + $0xc8] sm:$0xff]
          %v2269 = vld [vmem:[#allocation2 + $0xd0] sm:$0xff]
          %v2270 = vld [vmem:[#allocation2 + $0xd8] sm:$0xff]
          %v2271 = vld [vmem:[#allocation2 + $0xe0] sm:$0xff]
          %v2272 = vld [vmem:[#allocation2 + $0xe8] sm:$0xff]
          %v2273 = vld [vmem:[#allocation2 + $0xf0] sm:$0xff]
          %v2274 = vld [vmem:[#allocation2 + $0xf8] sm:$0xff]
          %v2275 = vld [vmem:[%s389] sm:$0xff]
          %v2276 = vld [vmem:[%s389 + $0x8] sm:$0xff]
          %v2277 = vld [vmem:[%s389 + $0x10] sm:$0xff]
          %v2278 = vld [vmem:[%s389 + $0x18] sm:$0xff]
          %v2279 = vld [vmem:[%s389 + $0x20] sm:$0xff]
          %v2280 = vld [vmem:[%s389 + $0x28] sm:$0xff]
          %v2281 = vld [vmem:[%s389 + $0x30] sm:$0xff]
          %v2282 = vld [vmem:[%s389 + $0x38] sm:$0xff]
          %v2283 = vld [vmem:[%s389 + $0x40] sm:$0xff]
          %v2284 = vld [vmem:[%s389 + $0x48] sm:$0xff]
          %v2285 = vld [vmem:[%s389 + $0x50] sm:$0xff]
          %v2286 = vld [vmem:[%s389 + $0x58] sm:$0xff]
          %v2287 = vld [vmem:[%s389 + $0x60] sm:$0xff]
          %v2288 = vld [vmem:[%s389 + $0x68] sm:$0xff]
          %v2289 = vld [vmem:[%s389 + $0x70] sm:$0xff]
          %v2290 = vld [vmem:[%s389 + $0x78] sm:$0xff]
          %v2291 = vld [vmem:[%s389 + $0x80] sm:$0xff]
          %v2292 = vld [vmem:[%s389 + $0x88] sm:$0xff]
          %v2293 = vld [vmem:[%s389 + $0x90] sm:$0xff]
          %v2294 = vld [vmem:[%s389 + $0x98] sm:$0xff]
          %v2295 = vld [vmem:[%s389 + $0xa0] sm:$0xff]
          %v2296 = vld [vmem:[%s389 + $0xa8] sm:$0xff]
          %v2297 = vld [vmem:[%s389 + $0xb0] sm:$0xff]
          %v2298 = vld [vmem:[%s389 + $0xb8] sm:$0xff]
          %v2299 = vld [vmem:[%s389 + $0xc0] sm:$0xff]
          %v2300 = vld [vmem:[%s389 + $0xc8] sm:$0xff]
          %v2301 = vld [vmem:[%s389 + $0xd0] sm:$0xff]
          %v2302 = vld [vmem:[%s389 + $0xd8] sm:$0xff]
          %v2303 = vld [vmem:[%s389 + $0xe0] sm:$0xff]
          %v2304 = vld [vmem:[%s389 + $0xe8] sm:$0xff]
          %v2305 = vld [vmem:[%s389 + $0xf0] sm:$0xff]
          %v2306 = vld [vmem:[%s389 + $0xf8] sm:$0xff]
          %2308 = vset.pattern.permute.xlu0 0
          %2309 = vperm.xlu0 %2308, %v2275
          %v2310 = vpop.permute.xlu0 %2309
          %2313 = vset.pattern.permute.xlu0 0
          %2314 = vperm.xlu0 %2313, %v2276
          %v2315 = vpop.permute.xlu0 %2314
          %2318 = vset.pattern.permute.xlu0 0
          %2319 = vperm.xlu0 %2318, %v2277
          %v2320 = vpop.permute.xlu0 %2319
          %2323 = vset.pattern.permute.xlu0 0
          %2324 = vperm.xlu0 %2323, %v2278
          %v2325 = vpop.permute.xlu0 %2324
          %2328 = vset.pattern.permute.xlu0 0
          %2329 = vperm.xlu0 %2328, %v2279
          %v2330 = vpop.permute.xlu0 %2329
          %2333 = vset.pattern.permute.xlu0 0
          %2334 = vperm.xlu0 %2333, %v2280
          %v2335 = vpop.permute.xlu0 %2334
          %2338 = vset.pattern.permute.xlu0 0
          %2339 = vperm.xlu0 %2338, %v2281
          %v2340 = vpop.permute.xlu0 %2339
          %2343 = vset.pattern.permute.xlu0 0
          %2344 = vperm.xlu0 %2343, %v2282
          %v2345 = vpop.permute.xlu0 %2344
          %2348 = vset.pattern.permute.xlu0 0
          %2349 = vperm.xlu0 %2348, %v2283
          %v2350 = vpop.permute.xlu0 %2349
          %2353 = vset.pattern.permute.xlu0 0
          %2354 = vperm.xlu0 %2353, %v2284
          %v2355 = vpop.permute.xlu0 %2354
          %2358 = vset.pattern.permute.xlu0 0
          %2359 = vperm.xlu0 %2358, %v2285
          %v2360 = vpop.permute.xlu0 %2359
          %2363 = vset.pattern.permute.xlu0 0
          %2364 = vperm.xlu0 %2363, %v2286
          %v2365 = vpop.permute.xlu0 %2364
          %2368 = vset.pattern.permute.xlu0 0
          %2369 = vperm.xlu0 %2368, %v2287
          %v2370 = vpop.permute.xlu0 %2369
          %2373 = vset.pattern.permute.xlu0 0
          %2374 = vperm.xlu0 %2373, %v2288
          %v2375 = vpop.permute.xlu0 %2374
          %2378 = vset.pattern.permute.xlu0 0
          %2379 = vperm.xlu0 %2378, %v2289
          %v2380 = vpop.permute.xlu0 %2379
          %2383 = vset.pattern.permute.xlu0 0
          %2384 = vperm.xlu0 %2383, %v2290
          %v2385 = vpop.permute.xlu0 %2384
          %2388 = vset.pattern.permute.xlu0 0
          %2389 = vperm.xlu0 %2388, %v2291
          %v2390 = vpop.permute.xlu0 %2389
          %2393 = vset.pattern.permute.xlu0 0
          %2394 = vperm.xlu0 %2393, %v2292
          %v2395 = vpop.permute.xlu0 %2394
          %2398 = vset.pattern.permute.xlu0 0
          %2399 = vperm.xlu0 %2398, %v2293
          %v2400 = vpop.permute.xlu0 %2399
          %2403 = vset.pattern.permute.xlu0 0
          %2404 = vperm.xlu0 %2403, %v2294
          %v2405 = vpop.permute.xlu0 %2404
          %2408 = vset.pattern.permute.xlu0 0
          %2409 = vperm.xlu0 %2408, %v2295
          %v2410 = vpop.permute.xlu0 %2409
          %2413 = vset.pattern.permute.xlu0 0
          %2414 = vperm.xlu0 %2413, %v2296
          %v2415 = vpop.permute.xlu0 %2414
          %2418 = vset.pattern.permute.xlu0 0
          %2419 = vperm.xlu0 %2418, %v2297
          %v2420 = vpop.permute.xlu0 %2419
          %2423 = vset.pattern.permute.xlu0 0
          %2424 = vperm.xlu0 %2423, %v2298
          %v2425 = vpop.permute.xlu0 %2424
          %2428 = vset.pattern.permute.xlu0 0
          %2429 = vperm.xlu0 %2428, %v2299
          %v2430 = vpop.permute.xlu0 %2429
          %2433 = vset.pattern.permute.xlu0 0
          %2434 = vperm.xlu0 %2433, %v2300
          %v2435 = vpop.permute.xlu0 %2434
          %2438 = vset.pattern.permute.xlu0 0
          %2439 = vperm.xlu0 %2438, %v2301
          %v2440 = vpop.permute.xlu0 %2439
          %2443 = vset.pattern.permute.xlu0 0
          %2444 = vperm.xlu0 %2443, %v2302
          %v2445 = vpop.permute.xlu0 %2444
          %2448 = vset.pattern.permute.xlu0 0
          %2449 = vperm.xlu0 %2448, %v2303
          %v2450 = vpop.permute.xlu0 %2449
          %2453 = vset.pattern.permute.xlu0 0
          %2454 = vperm.xlu0 %2453, %v2304
          %v2455 = vpop.permute.xlu0 %2454
          %2458 = vset.pattern.permute.xlu0 0
          %2459 = vperm.xlu0 %2458, %v2305
          %v2460 = vpop.permute.xlu0 %2459
          %2463 = vset.pattern.permute.xlu0 0
          %2464 = vperm.xlu0 %2463, %v2306
          %v2465 = vpop.permute.xlu0 %2464
          %v2467 = vmul.f32 %v2243, %v2310
          %v2468 = vmul.f32 %v2244, %v2315
          %v2469 = vmul.f32 %v2245, %v2320
          %v2470 = vmul.f32 %v2246, %v2325
          %v2471 = vmul.f32 %v2247, %v2330
          %v2472 = vmul.f32 %v2248, %v2335
          %v2473 = vmul.f32 %v2249, %v2340
          %v2474 = vmul.f32 %v2250, %v2345
          %v2475 = vmul.f32 %v2251, %v2350
          %v2476 = vmul.f32 %v2252, %v2355
          %v2477 = vmul.f32 %v2253, %v2360
          %v2478 = vmul.f32 %v2254, %v2365
          %v2479 = vmul.f32 %v2255, %v2370
          %v2480 = vmul.f32 %v2256, %v2375
          %v2481 = vmul.f32 %v2257, %v2380
          %v2482 = vmul.f32 %v2258, %v2385
          %v2483 = vmul.f32 %v2259, %v2390
          %v2484 = vmul.f32 %v2260, %v2395
          %v2485 = vmul.f32 %v2261, %v2400
          %v2486 = vmul.f32 %v2262, %v2405
          %v2487 = vmul.f32 %v2263, %v2410
          %v2488 = vmul.f32 %v2264, %v2415
          %v2489 = vmul.f32 %v2265, %v2420
          %v2490 = vmul.f32 %v2266, %v2425
          %v2491 = vmul.f32 %v2267, %v2430
          %v2492 = vmul.f32 %v2268, %v2435
          %v2493 = vmul.f32 %v2269, %v2440
          %v2494 = vmul.f32 %v2270, %v2445
          %v2495 = vmul.f32 %v2271, %v2450
          %v2496 = vmul.f32 %v2272, %v2455
          %v2497 = vmul.f32 %v2273, %v2460
          %v2498 = vmul.f32 %v2274, %v2465
          %v2499 = vld [vmem:[%s6] sm:$0x1]
          %v2501 = vperm.slane %v2499, 0
          %v2503 = vadd.f32 %v2467, %v2501
          %v2504 = vadd.f32 %v2468, %v2501
          %v2505 = vadd.f32 %v2469, %v2501
          %v2506 = vadd.f32 %v2470, %v2501
          %v2507 = vadd.f32 %v2471, %v2501
          %v2508 = vadd.f32 %v2472, %v2501
          %v2509 = vadd.f32 %v2473, %v2501
          %v2510 = vadd.f32 %v2474, %v2501
          %v2511 = vadd.f32 %v2475, %v2501
          %v2512 = vadd.f32 %v2476, %v2501
          %v2513 = vadd.f32 %v2477, %v2501
          %v2514 = vadd.f32 %v2478, %v2501
          %v2515 = vadd.f32 %v2479, %v2501
          %v2516 = vadd.f32 %v2480, %v2501
          %v2517 = vadd.f32 %v2481, %v2501
          %v2518 = vadd.f32 %v2482, %v2501
          %v2519 = vadd.f32 %v2483, %v2501
          %v2520 = vadd.f32 %v2484, %v2501
          %v2521 = vadd.f32 %v2485, %v2501
          %v2522 = vadd.f32 %v2486, %v2501
          %v2523 = vadd.f32 %v2487, %v2501
          %v2524 = vadd.f32 %v2488, %v2501
          %v2525 = vadd.f32 %v2489, %v2501
          %v2526 = vadd.f32 %v2490, %v2501
          %v2527 = vadd.f32 %v2491, %v2501
          %v2528 = vadd.f32 %v2492, %v2501
          %v2529 = vadd.f32 %v2493, %v2501
          %v2530 = vadd.f32 %v2494, %v2501
          %v2531 = vadd.f32 %v2495, %v2501
          %v2532 = vadd.f32 %v2496, %v2501
          %v2533 = vadd.f32 %v2497, %v2501
          %v2534 = vadd.f32 %v2498, %v2501
          %v2535 = vmax.f32 %v2503, 0.0
          %v2536 = vmax.f32 %v2504, 0.0
          %v2537 = vmax.f32 %v2505, 0.0
          %v2538 = vmax.f32 %v2506, 0.0
          %v2539 = vmax.f32 %v2507, 0.0
          %v2540 = vmax.f32 %v2508, 0.0
          %v2541 = vmax.f32 %v2509, 0.0
          %v2542 = vmax.f32 %v2510, 0.0
          %v2543 = vmax.f32 %v2511, 0.0
          %v2544 = vmax.f32 %v2512, 0.0
          %v2545 = vmax.f32 %v2513, 0.0
          %v2546 = vmax.f32 %v2514, 0.0
          %v2547 = vmax.f32 %v2515, 0.0
          %v2548 = vmax.f32 %v2516, 0.0
          %v2549 = vmax.f32 %v2517, 0.0
          %v2550 = vmax.f32 %v2518, 0.0
          %v2551 = vmax.f32 %v2519, 0.0
          %v2552 = vmax.f32 %v2520, 0.0
          %v2553 = vmax.f32 %v2521, 0.0
          %v2554 = vmax.f32 %v2522, 0.0
          %v2555 = vmax.f32 %v2523, 0.0
          %v2556 = vmax.f32 %v2524, 0.0
          %v2557 = vmax.f32 %v2525, 0.0
          %v2558 = vmax.f32 %v2526, 0.0
          %v2559 = vmax.f32 %v2527, 0.0
          %v2560 = vmax.f32 %v2528, 0.0
          %v2561 = vmax.f32 %v2529, 0.0
          %v2562 = vmax.f32 %v2530, 0.0
          %v2563 = vmax.f32 %v2531, 0.0
          %v2564 = vmax.f32 %v2532, 0.0
          %v2565 = vmax.f32 %v2533, 0.0
          %v2566 = vmax.f32 %v2534, 0.0
          %v2567 = vpack.c.bf16 %v2535, %v2535
          %v2568 = vpack.c.bf16 %v2536, %v2536
          %v2569 = vpack.c.bf16 %v2537, %v2537
          %v2570 = vpack.c.bf16 %v2538, %v2538
          %v2571 = vpack.c.bf16 %v2539, %v2539
          %v2572 = vpack.c.bf16 %v2540, %v2540
          %v2573 = vpack.c.bf16 %v2541, %v2541
          %v2574 = vpack.c.bf16 %v2542, %v2542
          %v2575 = vpack.c.bf16 %v2543, %v2543
          %v2576 = vpack.c.bf16 %v2544, %v2544
          %v2577 = vpack.c.bf16 %v2545, %v2545
          %v2578 = vpack.c.bf16 %v2546, %v2546
          %v2579 = vpack.c.bf16 %v2547, %v2547
          %v2580 = vpack.c.bf16 %v2548, %v2548
          %v2581 = vpack.c.bf16 %v2549, %v2549
          %v2582 = vpack.c.bf16 %v2550, %v2550
          %v2583 = vpack.c.bf16 %v2551, %v2551
          %v2584 = vpack.c.bf16 %v2552, %v2552
          %v2585 = vpack.c.bf16 %v2553, %v2553
          %v2586 = vpack.c.bf16 %v2554, %v2554
          %v2587 = vpack.c.bf16 %v2555, %v2555
          %v2588 = vpack.c.bf16 %v2556, %v2556
          %v2589 = vpack.c.bf16 %v2557, %v2557
          %v2590 = vpack.c.bf16 %v2558, %v2558
          %v2591 = vpack.c.bf16 %v2559, %v2559
          %v2592 = vpack.c.bf16 %v2560, %v2560
          %v2593 = vpack.c.bf16 %v2561, %v2561
          %v2594 = vpack.c.bf16 %v2562, %v2562
          %v2595 = vpack.c.bf16 %v2563, %v2563
          %v2596 = vpack.c.bf16 %v2564, %v2564
          %v2597 = vpack.c.bf16 %v2565, %v2565
          %v2598 = vpack.c.bf16 %v2566, %v2566
          %2599 = vst [vmem:[%s372] sm:$0xf] %v2567
          %2600 = vst [vmem:[%s372 + $0x4] sm:$0xf] %v2568
          %2601 = vst [vmem:[%s372 + $0x8] sm:$0xf] %v2569
          %2602 = vst [vmem:[%s372 + $0xc] sm:$0xf] %v2570
          %2603 = vst [vmem:[%s372 + $0x10] sm:$0xf] %v2571
          %2604 = vst [vmem:[%s372 + $0x14] sm:$0xf] %v2572
          %2605 = vst [vmem:[%s372 + $0x18] sm:$0xf] %v2573
          %2606 = vst [vmem:[%s372 + $0x1c] sm:$0xf] %v2574
          %2607 = vst [vmem:[%s372 + $0x20] sm:$0xf] %v2575
          %2608 = vst [vmem:[%s372 + $0x24] sm:$0xf] %v2576
          %2609 = vst [vmem:[%s372 + $0x28] sm:$0xf] %v2577
          %2610 = vst [vmem:[%s372 + $0x2c] sm:$0xf] %v2578
          %2611 = vst [vmem:[%s372 + $0x30] sm:$0xf] %v2579
          %2612 = vst [vmem:[%s372 + $0x34] sm:$0xf] %v2580
          %2613 = vst [vmem:[%s372 + $0x38] sm:$0xf] %v2581
          %2614 = vst [vmem:[%s372 + $0x3c] sm:$0xf] %v2582
          %2615 = vst [vmem:[%s372 + $0x40] sm:$0xf] %v2583
          %2616 = vst [vmem:[%s372 + $0x44] sm:$0xf] %v2584
          %2617 = vst [vmem:[%s372 + $0x48] sm:$0xf] %v2585
          %2618 = vst [vmem:[%s372 + $0x4c] sm:$0xf] %v2586
          %2619 = vst [vmem:[%s372 + $0x50] sm:$0xf] %v2587
          %2620 = vst [vmem:[%s372 + $0x54] sm:$0xf] %v2588
          %2621 = vst [vmem:[%s372 + $0x58] sm:$0xf] %v2589
          %2622 = vst [vmem:[%s372 + $0x5c] sm:$0xf] %v2590
          %2623 = vst [vmem:[%s372 + $0x60] sm:$0xf] %v2591
          %2624 = vst [vmem:[%s372 + $0x64] sm:$0xf] %v2592
          %2625 = vst [vmem:[%s372 + $0x68] sm:$0xf] %v2593
          %2626 = vst [vmem:[%s372 + $0x6c] sm:$0xf] %v2594
          %2627 = vst [vmem:[%s372 + $0x70] sm:$0xf] %v2595
          %2628 = vst [vmem:[%s372 + $0x74] sm:$0xf] %v2596
          %2629 = vst [vmem:[%s372 + $0x78] sm:$0xf] %v2597
          %2630 = vst [vmem:[%s372 + $0x7c] sm:$0xf] %v2598
        $region64: #{tpu_custom_call.1} parent=47 // pred_fallthru
          _
        %s2631 = sand.u32 %s213, 1
        %s2632 = scalar_lea.sflag [#allocation6], %s2631
        %s2633 = sand.u32 %s213, 1
        %s2634 = smul.addr %s2633, 128
        %s2635 = scalar_lea.vmem [#allocation9], %s2634
        // Predicated region
        $region65: #{tpu_custom_call.1} parent=47 // pred_check
          %p2636 = pneg %p223
        $region66: #{tpu_custom_call.1} parent=47 // pred_check_branch
          %2638 = sbr.rel (%p2636) target = $region68
        $region67: #{tpu_custom_call.1} parent=47 // pred_region
          %s2639 = smul.u32 32, %s28
          %2641 = vsyncadd %s2632, 0
          %s2642 = smul.addr %s2639, 4
          %s2643 = scalar_lea.hbm %s7, %s2642
          %s2644 = sshll.u32 %s2635, 4
          %s2645 = int_to_ptr.vmem [resolvable:$true] %s2644
          %s2646 = sshll.u32 %s2643, 4
          %s2647 = int_to_ptr.hbm [resolvable:$true] %s2646
          %2652 = dma.vmem_to_hbm [thread:$0]  %s2645, 2048, %s2647, %s2632, 64, 64, 4
        $region68: #{tpu_custom_call.1} parent=47 // pred_fallthru
          _
      $region48: #{tpu_custom_call.1} parent=5 // pred_fallthru
        _
      %p2653 = scmp.le.s32.totalorder 2, %s19
      // Predicated region
      $region69: #{tpu_custom_call.1} parent=5 // pred_check
        %p2654 = pneg %p2653
      $region70: #{tpu_custom_call.1} parent=5 // pred_check_branch
        %2656 = sbr.rel (%p2654) target = $region72
      $region71: #{tpu_custom_call.1} parent=5 // pred_region
        %s2657 = ssub.s32 %s19, 2
        // Predicated region
        $region73: #{tpu_custom_call.1} parent=71 // pred_check
          %p2658 = pneg %p229
        $region74: #{tpu_custom_call.1} parent=71 // pred_check_branch
          %2660 = sbr.rel (%p2658) target = $region76
        $region75: #{tpu_custom_call.1} parent=71 // pred_region
          %s2661 = sand.u32 %s214, 1
          %s2662 = scalar_lea.sflag [#allocation6], %s2661
          %s2663 = sand.u32 %s214, 1
          %s2664 = smul.addr %s2663, 128
          %s2665 = scalar_lea.vmem [#allocation9], %s2664
          %2667 = dma.done %s2662, 2048
        $region76: #{tpu_custom_call.1} parent=71 // pred_fallthru
          _
      $region72: #{tpu_custom_call.1} parent=5 // pred_fallthru
        _
    $region6: #{tpu_custom_call.1} parent=1 // loop_footer
      %s23 = sadd.s32 1, %s19
    $region7: #{tpu_custom_call.1} parent=1 // loop_footer_branch
      %18 = sbr.rel target = $region3
    $region8: #{tpu_custom_call.1} parent=1 // loop_exit
      _
    %2668 = vsyncpa [#allocation5], 1
    %s2669 = scalar_lea.sflag [#allocation5], 1
    %2670 = vsyncpa %s2669, 1
    %2671 = vsyncpa [#allocation8], 1
    %2672 = vsyncpa [#allocation6], 1
    %s2673 = scalar_lea.sflag [#allocation6], 1
    %2674 = vsyncpa %s2673, 1

</llo_original>
